<compile_context>
chip_gen: v6e
topology: v6e:2x2x1
jax: 0.10.0
libtpu: 0.0.40
codegen_flags: <defaults>
</compile_context>

<pallas_src>
import functools

import jax
import jax.numpy as jnp
from jax import lax
from jax.experimental import pallas as pl
from jax.experimental.pallas import tpu as pltpu


# ----------------------------------------------------------------------------
# Config (mirrors DownConvBlock(level=1, config=...))
# ----------------------------------------------------------------------------
LEVEL = 1
N_KERNELS_INIT = 4
N_KERNELS_MAX = 32
INORM_EPS = 1e-5


def _calc_n_kernels(n_init: int, level: int, bound: int) -> int:
    return min(bound, n_init * 2 ** level)


C_IN = _calc_n_kernels(N_KERNELS_INIT, LEVEL - 1, N_KERNELS_MAX)    # 4
C_OUT = _calc_n_kernels(N_KERNELS_INIT, LEVEL, N_KERNELS_MAX)       # 8


def _halo_pad(H: int, W: int) -> int:
    # Halo needed for flat D*H*W lane shifts (|shift| <= H*W + W + 1), rounded up to a
    # 128-lane multiple so the interior activation store is lane-tile aligned.
    return ((H * W + W + 1 + 127) // 128) * 128


# ----------------------------------------------------------------------------
# In-kernel ConvLayer: 3x3x3 conv (3 MXU matmuls over a shared (kh,kw) patch)
# + InstanceNorm + ReLU
# ----------------------------------------------------------------------------
def _conv_in_relu(x2d, w_ref, mrows, pad_ref, patch_ref, *, spatial, eps):
    """One ConvLayer on a lane-dense (C, S) activation. Returns (C_out, S) float32."""
    D, H, W = spatial
    S = D * H * W
    HW = H * W
    Se = S + 2 * HW                      # extended window covering all 3 kd shifts
    PAD = _halo_pad(H, W)
    C = x2d.shape[0]

    # Zero only the halo columns (interior is fully overwritten each step).
    pad_ref[:, :PAD] = jnp.zeros((C, PAD), dtype=pad_ref.dtype)
    pad_ref[:, PAD + S:PAD + S + PAD] = jnp.zeros((C, PAD), dtype=pad_ref.dtype)
    pad_ref[:, PAD:PAD + S] = x2d.astype(pad_ref.dtype)

    # Shared (kh,kw) patch: 9 lane-shifted, boundary-masked copies over the extended window.
    # (kd handled below by window offsets into this patch -> 9 copies instead of 27.)
    base = PAD - HW
    for kh in range(3):
        for kw in range(3):
            t = kh * 3 + kw
            sh = (kh - 1) * W + (kw - 1)
            src = pad_ref[:, base + sh:base + sh + Se]                # (C, Se)
            if t == 4:                                                # center tap: mask all-ones
                patch_ref[t * C:(t + 1) * C, :] = src
            else:
                patch_ref[t * C:(t + 1) * C, :] = src * mrows[t]

    # Conv as 3 MXU matmuls (one per kd), spatial axis S on the lane / output-column axis.
    y = jnp.dot(w_ref[0], patch_ref[:, 0:S], preferred_element_type=jnp.float32)
    for kd in range(1, 3):
        y = y + jnp.dot(w_ref[kd], patch_ref[:, kd * HW:kd * HW + S],
                        preferred_element_type=jnp.float32)           # (C_out, S) f32

    # InstanceNorm3d (affine=False, biased variance): one stats pass + one normalize pass (f32).
    inv_s = 1.0 / S
    ssum = jnp.sum(y, axis=1, keepdims=True)
    ssq = jnp.sum(y * y, axis=1, keepdims=True)
    mean = ssum * inv_s
    var = ssq * inv_s - mean * mean
    yn = (y - mean) * lax.rsqrt(var + eps)
    # ReLU; Dropout is identity (rate 0 / eval mode).
    # TODO(synk): train-mode Dropout (rate > 0) would need pltpu.prng_seed/prng_random_bits.
    return jnp.maximum(yn, 0.0)


def _down_block_kernel(x_ref, w1_ref, w2_ref, mask_ref, o_ref,
                       pad1, patch1, pad2, patch2, *, spatial, eps):
    # Load the 9 (kh, kw) boundary-mask rows once; reused by both conv layers and all kd taps.
    mrows = [mask_ref[t:t + 1, :] for t in range(9)]
    h1 = _conv_in_relu(x_ref[0], w1_ref, mrows, pad1, patch1, spatial=spatial, eps=eps)
    h2 = _conv_in_relu(h1, w2_ref, mrows, pad2, patch2, spatial=spatial, eps=eps)
    o_ref[0] = h2.astype(o_ref.dtype)                                 # lane-dense (C_out, S) store


# ----------------------------------------------------------------------------
# Wrapper
# ----------------------------------------------------------------------------
def maxpool3d_2x2x2(x):
    # Pairwise maxima along W, H, D (cheap, single pass over 1x data; no transpose shuffle).
    x = jnp.maximum(x[..., 0::2], x[..., 1::2])                       # W
    x = jnp.maximum(x[..., 0::2, :], x[..., 1::2, :])                 # H
    x = jnp.maximum(x[..., 0::2, :, :], x[..., 1::2, :, :])           # D
    return x


def _boundary_masks_ext(D, H, W):
    # mask[kh*3+kw, j] == 1.0 iff tap (kh, kw) at extended flat position j stays inside the
    # H/W extent (the D boundary is handled by the zero halo of the flat padded buffer).
    # The h/w pattern is periodic in H*W, so the same formula covers the extended window.
    S = D * H * W
    HW = H * W
    Se = S + 2 * HW
    idx = jnp.arange(Se, dtype=jnp.int32)
    h = (idx // W) % H
    w = idx % W
    rows = []
    for kh in range(3):
        for kw in range(3):
            ok = ((h + (kh - 1) >= 0) & (h + (kh - 1) < H) &
                  (w + (kw - 1) >= 0) & (w + (kw - 1) < W))
            rows.append(ok)
    return jnp.stack(rows, axis=0).astype(jnp.float32)                # (9, Se)


def down_conv_block(x, weights, *, eps=INORM_EPS, mxu_dtype=jnp.float32):
    """x: (N, C_in, D, H, W); weights: (w1 (C_out, C_in, 3,3,3), w2 (C_out, C_out, 3,3,3)).

    Set mxu_dtype=jnp.bfloat16 on v6e/v7x to run the MXU matmuls in bf16 (stats stay f32).
    """
    N, C, D, H, W = x.shape
    w1, w2 = weights
    Cout = w1.shape[0]
    D2, H2, W2 = D // 2, H // 2, W // 2
    S = D2 * H2 * W2
    HW = H2 * W2
    Se = S + 2 * HW
    PAD = _halo_pad(H2, W2)

    y = maxpool3d_2x2x2(x).reshape(N, C, S)           # free reshape -> lane-dense (C, S) layout
    # Weight matrices as (kd, C_out, (kh, kw, c)) to match the shared (kh,kw) patch layout.
    w1m = jnp.transpose(w1, (2, 0, 3, 4, 1)).reshape(3, Cout, 9 * C).astype(mxu_dtype)
    w2m = jnp.transpose(w2, (2, 0, 3, 4, 1)).reshape(3, Cout, 9 * Cout).astype(mxu_dtype)
    mask9 = _boundary_masks_ext(D2, H2, W2).astype(mxu_dtype)         # (9, Se)

    out = pl.pallas_call(
        functools.partial(_down_block_kernel, spatial=(D2, H2, W2), eps=eps),
        out_shape=jax.ShapeDtypeStruct((N, Cout, S), x.dtype),
        grid=(N,),
        in_specs=[
            pl.BlockSpec((1, C, S), lambda n: (n, 0, 0)),             # per-sample pooled activation
            pl.BlockSpec((3, Cout, 9 * C), lambda n: (0, 0, 0)),      # conv1 weights (stay resident)
            pl.BlockSpec((3, Cout, 9 * Cout), lambda n: (0, 0, 0)),   # conv2 weights (stay resident)
            pl.BlockSpec((9, Se), lambda n: (0, 0)),                  # boundary masks (stay resident)
        ],
        out_specs=pl.BlockSpec((1, Cout, S), lambda n: (n, 0, 0)),
        scratch_shapes=[
            pltpu.VMEM((C, S + 2 * PAD), mxu_dtype),                  # padded activation, layer 1
            pltpu.VMEM((9 * C, Se), mxu_dtype),                       # shared (kh,kw) patch, layer 1
            pltpu.VMEM((Cout, S + 2 * PAD), mxu_dtype),               # padded activation, layer 2
            pltpu.VMEM((9 * Cout, Se), mxu_dtype),                    # shared (kh,kw) patch, layer 2
        ],
        compiler_params=pltpu.CompilerParams(
            dimension_semantics=("parallel",)),
    )(y, w1m, w2m, mask9)
    return out.reshape(N, Cout, D2, H2, W2)


# ----------------------------------------------------------------------------
# Pure-JAX reference for validation
# ----------------------------------------------------------------------------
def _reference(x, weights, eps=INORM_EPS):
    y = lax.reduce_window(x, -jnp.inf, lax.max,
                          (1, 1, 2, 2, 2), (1, 1, 2, 2, 2), "VALID")
    for w in weights:
        y = lax.conv_general_dilated(y, w, (1, 1, 1), [(1, 1)] * 3,
                                     dimension_numbers=("NCDHW", "OIDHW", "NCDHW"),
                                     precision=lax.Precision.HIGHEST)
        mean = y.mean(axis=(2, 3, 4), keepdims=True)
        var = ((y - mean) ** 2).mean(axis=(2, 3, 4), keepdims=True)
        y = jnp.maximum((y - mean) / jnp.sqrt(var + eps), 0.0)
    return y


if __name__ == "__main__":
    key = jax.random.PRNGKey(0)
    kx, k1, k2 = jax.random.split(key, 3)
    # input (N=2, C_in=4, 16^3) -> pooled (8^3) -> output (2, 8, 8, 8, 8)
    x = jax.random.normal(kx, (2, C_IN, 16, 16, 16), jnp.float32)
    w1 = jax.random.normal(k1, (C_OUT, C_IN, 3, 3, 3), jnp.float32) / jnp.sqrt(C_IN * 27.0)
    w2 = jax.random.normal(k2, (C_OUT, C_OUT, 3, 3, 3), jnp.float32) / jnp.sqrt(C_OUT * 27.0)
    weights = (w1, w2)

    fwd = jax.jit(down_conv_block)
    out = jax.block_until_ready(fwd(x, weights))

    ref = _reference(x, weights)
    assert out.shape == (2, C_OUT, 8, 8, 8), out.shape
    max_err = float(jnp.max(jnp.abs(out - ref)))
    assert jnp.allclose(out, ref, rtol=1e-2, atol=1e-2), max_err
    print("KERNEL_OK")
</pallas_src>

<mosaic_0001>
module attributes {stable_mosaic.version = 11 : i64} {
  func.func @_down_block_kernel(%arg0: i32, %arg1: memref<1x4x512xf32, #tpu.memory_space<vmem>>, %arg2: memref<3x8x36xf32, #tpu.memory_space<vmem>>, %arg3: memref<3x8x72xf32, #tpu.memory_space<vmem>>, %arg4: memref<9x640xf32, #tpu.memory_space<vmem>>, %arg5: memref<1x8x512xf32, #tpu.memory_space<vmem>>, %arg6: memref<4x768xf32, #tpu.memory_space<vmem>>, %arg7: memref<36x640xf32, #tpu.memory_space<vmem>>, %arg8: memref<8x768xf32, #tpu.memory_space<vmem>>, %arg9: memref<72x640xf32, #tpu.memory_space<vmem>>) attributes {dimension_semantics = [#tpu.dimension_semantics<parallel>], iteration_bounds = array<i64: 2>, scalar_prefetch = 0 : i64, scratch_operands = 4 : i64, tpu.core_type = #tpu.core_type<tc>, window_params = [{transform_indices = @transform_0, window_bounds = array<i64: 1, 4, 512>}, {pipeline_mode = #tpu.pipeline_mode<synchronous>, transform_indices = @transform_1, window_bounds = array<i64: 3, 8, 36>}, {pipeline_mode = #tpu.pipeline_mode<synchronous>, transform_indices = @transform_2, window_bounds = array<i64: 3, 8, 72>}, {pipeline_mode = #tpu.pipeline_mode<synchronous>, transform_indices = @transform_3, window_bounds = array<i64: 9, 640>}, {transform_indices = @transform_4, window_bounds = array<i64: 1, 8, 512>}]} {
    %c0 = arith.constant 0 : index
    %c0_0 = arith.constant 0 : index
    %0 = vector.load %arg4[%c0, %c0_0] : memref<9x640xf32, #tpu.memory_space<vmem>>, vector<1x640xf32>
    %c1 = arith.constant 1 : index
    %c0_1 = arith.constant 0 : index
    %1 = vector.load %arg4[%c1, %c0_1] : memref<9x640xf32, #tpu.memory_space<vmem>>, vector<1x640xf32>
    %c2 = arith.constant 2 : index
    %c0_2 = arith.constant 0 : index
    %2 = vector.load %arg4[%c2, %c0_2] : memref<9x640xf32, #tpu.memory_space<vmem>>, vector<1x640xf32>
    %c3 = arith.constant 3 : index
    %c0_3 = arith.constant 0 : index
    %3 = vector.load %arg4[%c3, %c0_3] : memref<9x640xf32, #tpu.memory_space<vmem>>, vector<1x640xf32>
    %c5 = arith.constant 5 : index
    %c0_4 = arith.constant 0 : index
    %4 = vector.load %arg4[%c5, %c0_4] : memref<9x640xf32, #tpu.memory_space<vmem>>, vector<1x640xf32>
    %c6 = arith.constant 6 : index
    %c0_5 = arith.constant 0 : index
    %5 = vector.load %arg4[%c6, %c0_5] : memref<9x640xf32, #tpu.memory_space<vmem>>, vector<1x640xf32>
    %c7 = arith.constant 7 : index
    %c0_6 = arith.constant 0 : index
    %6 = vector.load %arg4[%c7, %c0_6] : memref<9x640xf32, #tpu.memory_space<vmem>>, vector<1x640xf32>
    %c8 = arith.constant 8 : index
    %c0_7 = arith.constant 0 : index
    %7 = vector.load %arg4[%c8, %c0_7] : memref<9x640xf32, #tpu.memory_space<vmem>>, vector<1x640xf32>
    %c0_8 = arith.constant 0 : index
    %c0_9 = arith.constant 0 : index
    %c0_10 = arith.constant 0 : index
    %8 = vector.load %arg1[%c0_8, %c0_9, %c0_10] : memref<1x4x512xf32, #tpu.memory_space<vmem>>, vector<1x4x512xf32>
    %9 = vector.shape_cast %8 : vector<1x4x512xf32> to vector<4x512xf32>
    %cst = arith.constant 0.000000e+00 : f32
    %10 = vector.broadcast %cst : f32 to vector<4x128xf32>
    %c0_11 = arith.constant 0 : index
    %c0_12 = arith.constant 0 : index
    %11 = vector.load %arg6[%c0_11, %c0_12] : memref<4x768xf32, #tpu.memory_space<vmem>>, vector<4x128xf32>
    tpu.vector_store %arg6[%c0_11, %c0_12], %10 {strides = array<i32>} : memref<4x768xf32, #tpu.memory_space<vmem>>, vector<4x128xf32>,
    %cst_13 = arith.constant 0.000000e+00 : f32
    %12 = vector.broadcast %cst_13 : f32 to vector<4x128xf32>
    %c0_14 = arith.constant 0 : index
    %c640 = arith.constant 640 : index
    %13 = vector.load %arg6[%c0_14, %c640] : memref<4x768xf32, #tpu.memory_space<vmem>>, vector<4x128xf32>
    tpu.vector_store %arg6[%c0_14, %c640], %12 {strides = array<i32>} : memref<4x768xf32, #tpu.memory_space<vmem>>, vector<4x128xf32>,
    %c0_15 = arith.constant 0 : index
    %c128 = arith.constant 128 : index
    %14 = vector.load %arg6[%c0_15, %c128] : memref<4x768xf32, #tpu.memory_space<vmem>>, vector<4x512xf32>
    tpu.vector_store %arg6[%c0_15, %c128], %9 {strides = array<i32>} : memref<4x768xf32, #tpu.memory_space<vmem>>, vector<4x512xf32>,
    %c0_16 = arith.constant 0 : index
    %c55 = arith.constant 55 : index
    %15 = vector.load %arg6[%c0_16, %c55] : memref<4x768xf32, #tpu.memory_space<vmem>>, vector<4x640xf32>
    %16 = vector.broadcast %0 : vector<1x640xf32> to vector<4x640xf32>
    %17 = arith.mulf %15, %16 : vector<4x640xf32>
    %c0_17 = arith.constant 0 : index
    %c0_18 = arith.constant 0 : index
    %18 = vector.load %arg7[%c0_17, %c0_18] : memref<36x640xf32, #tpu.memory_space<vmem>>, vector<4x640xf32>
    tpu.vector_store %arg7[%c0_17, %c0_18], %17 {strides = array<i32>} : memref<36x640xf32, #tpu.memory_space<vmem>>, vector<4x640xf32>,
    %c0_19 = arith.constant 0 : index
    %c56 = arith.constant 56 : index
    %19 = vector.load %arg6[%c0_19, %c56] : memref<4x768xf32, #tpu.memory_space<vmem>>, vector<4x640xf32>
    %20 = vector.broadcast %1 : vector<1x640xf32> to vector<4x640xf32>
    %21 = arith.mulf %19, %20 : vector<4x640xf32>
    %c4 = arith.constant 4 : index
    %c0_20 = arith.constant 0 : index
    %22 = vector.load %arg7[%c4, %c0_20] : memref<36x640xf32, #tpu.memory_space<vmem>>, vector<4x640xf32>
    tpu.vector_store %arg7[%c4, %c0_20], %21 {strides = array<i32>} : memref<36x640xf32, #tpu.memory_space<vmem>>, vector<4x640xf32>,
    %c0_21 = arith.constant 0 : index
    %c57 = arith.constant 57 : index
    %23 = vector.load %arg6[%c0_21, %c57] : memref<4x768xf32, #tpu.memory_space<vmem>>, vector<4x640xf32>
    %24 = vector.broadcast %2 : vector<1x640xf32> to vector<4x640xf32>
    %25 = arith.mulf %23, %24 : vector<4x640xf32>
    %c8_22 = arith.constant 8 : index
    %c0_23 = arith.constant 0 : index
    %26 = vector.load %arg7[%c8_22, %c0_23] : memref<36x640xf32, #tpu.memory_space<vmem>>, vector<4x640xf32>
    tpu.vector_store %arg7[%c8_22, %c0_23], %25 {strides = array<i32>} : memref<36x640xf32, #tpu.memory_space<vmem>>, vector<4x640xf32>,
    %c0_24 = arith.constant 0 : index
    %c63 = arith.constant 63 : index
    %27 = vector.load %arg6[%c0_24, %c63] : memref<4x768xf32, #tpu.memory_space<vmem>>, vector<4x640xf32>
    %28 = vector.broadcast %3 : vector<1x640xf32> to vector<4x640xf32>
    %29 = arith.mulf %27, %28 : vector<4x640xf32>
    %c12 = arith.constant 12 : index
    %c0_25 = arith.constant 0 : index
    %30 = vector.load %arg7[%c12, %c0_25] : memref<36x640xf32, #tpu.memory_space<vmem>>, vector<4x640xf32>
    tpu.vector_store %arg7[%c12, %c0_25], %29 {strides = array<i32>} : memref<36x640xf32, #tpu.memory_space<vmem>>, vector<4x640xf32>,
    %c0_26 = arith.constant 0 : index
    %c64 = arith.constant 64 : index
    %31 = vector.load %arg6[%c0_26, %c64] : memref<4x768xf32, #tpu.memory_space<vmem>>, vector<4x640xf32>
    %c16 = arith.constant 16 : index
    %c0_27 = arith.constant 0 : index
    %32 = vector.load %arg7[%c16, %c0_27] : memref<36x640xf32, #tpu.memory_space<vmem>>, vector<4x640xf32>
    tpu.vector_store %arg7[%c16, %c0_27], %31 {strides = array<i32>} : memref<36x640xf32, #tpu.memory_space<vmem>>, vector<4x640xf32>,
    %c0_28 = arith.constant 0 : index
    %c65 = arith.constant 65 : index
    %33 = vector.load %arg6[%c0_28, %c65] : memref<4x768xf32, #tpu.memory_space<vmem>>, vector<4x640xf32>
    %34 = vector.broadcast %4 : vector<1x640xf32> to vector<4x640xf32>
    %35 = arith.mulf %33, %34 : vector<4x640xf32>
    %c20 = arith.constant 20 : index
    %c0_29 = arith.constant 0 : index
    %36 = vector.load %arg7[%c20, %c0_29] : memref<36x640xf32, #tpu.memory_space<vmem>>, vector<4x640xf32>
    tpu.vector_store %arg7[%c20, %c0_29], %35 {strides = array<i32>} : memref<36x640xf32, #tpu.memory_space<vmem>>, vector<4x640xf32>,
    %c0_30 = arith.constant 0 : index
    %c71 = arith.constant 71 : index
    %37 = vector.load %arg6[%c0_30, %c71] : memref<4x768xf32, #tpu.memory_space<vmem>>, vector<4x640xf32>
    %38 = vector.broadcast %5 : vector<1x640xf32> to vector<4x640xf32>
    %39 = arith.mulf %37, %38 : vector<4x640xf32>
    %c24 = arith.constant 24 : index
    %c0_31 = arith.constant 0 : index
    %40 = vector.load %arg7[%c24, %c0_31] : memref<36x640xf32, #tpu.memory_space<vmem>>, vector<4x640xf32>
    tpu.vector_store %arg7[%c24, %c0_31], %39 {strides = array<i32>} : memref<36x640xf32, #tpu.memory_space<vmem>>, vector<4x640xf32>,
    %c0_32 = arith.constant 0 : index
    %c72 = arith.constant 72 : index
    %41 = vector.load %arg6[%c0_32, %c72] : memref<4x768xf32, #tpu.memory_space<vmem>>, vector<4x640xf32>
    %42 = vector.broadcast %6 : vector<1x640xf32> to vector<4x640xf32>
    %43 = arith.mulf %41, %42 : vector<4x640xf32>
    %c28 = arith.constant 28 : index
    %c0_33 = arith.constant 0 : index
    %44 = vector.load %arg7[%c28, %c0_33] : memref<36x640xf32, #tpu.memory_space<vmem>>, vector<4x640xf32>
    tpu.vector_store %arg7[%c28, %c0_33], %43 {strides = array<i32>} : memref<36x640xf32, #tpu.memory_space<vmem>>, vector<4x640xf32>,
    %c0_34 = arith.constant 0 : index
    %c73 = arith.constant 73 : index
    %45 = vector.load %arg6[%c0_34, %c73] : memref<4x768xf32, #tpu.memory_space<vmem>>, vector<4x640xf32>
    %46 = vector.broadcast %7 : vector<1x640xf32> to vector<4x640xf32>
    %47 = arith.mulf %45, %46 : vector<4x640xf32>
    %c32 = arith.constant 32 : index
    %c0_35 = arith.constant 0 : index
    %48 = vector.load %arg7[%c32, %c0_35] : memref<36x640xf32, #tpu.memory_space<vmem>>, vector<4x640xf32>
    tpu.vector_store %arg7[%c32, %c0_35], %47 {strides = array<i32>} : memref<36x640xf32, #tpu.memory_space<vmem>>, vector<4x640xf32>,
    %c0_36 = arith.constant 0 : index
    %c0_37 = arith.constant 0 : index
    %c0_38 = arith.constant 0 : index
    %49 = vector.load %arg2[%c0_36, %c0_37, %c0_38] : memref<3x8x36xf32, #tpu.memory_space<vmem>>, vector<1x8x36xf32>
    %50 = vector.shape_cast %49 : vector<1x8x36xf32> to vector<8x36xf32>
    %c0_39 = arith.constant 0 : index
    %c0_40 = arith.constant 0 : index
    %51 = vector.load %arg7[%c0_39, %c0_40] : memref<36x640xf32, #tpu.memory_space<vmem>>, vector<36x512xf32>
    %cst_41 = arith.constant dense<0.000000e+00> : vector<8x512xf32>
    %52 = tpu.matmul %50, %51, %cst_41 {dimension_numbers = #tpu.dot_dimension_numbers<[1], [0], [0], [1], [0, 0, 1, 1], [], []>} : vector<8x36xf32>, vector<36x512xf32>, vector<8x512xf32> -> vector<8x512xf32>
    %c1_42 = arith.constant 1 : index
    %c0_43 = arith.constant 0 : index
    %c0_44 = arith.constant 0 : index
    %53 = vector.load %arg2[%c1_42, %c0_43, %c0_44] : memref<3x8x36xf32, #tpu.memory_space<vmem>>, vector<1x8x36xf32>
    %54 = vector.shape_cast %53 : vector<1x8x36xf32> to vector<8x36xf32>
    %c0_45 = arith.constant 0 : index
    %c64_46 = arith.constant 64 : index
    %55 = vector.load %arg7[%c0_45, %c64_46] : memref<36x640xf32, #tpu.memory_space<vmem>>, vector<36x512xf32>
    %cst_47 = arith.constant dense<0.000000e+00> : vector<8x512xf32>
    %56 = tpu.matmul %54, %55, %cst_47 {dimension_numbers = #tpu.dot_dimension_numbers<[1], [0], [0], [1], [0, 0, 1, 1], [], []>} : vector<8x36xf32>, vector<36x512xf32>, vector<8x512xf32> -> vector<8x512xf32>
    %57 = arith.addf %52, %56 : vector<8x512xf32>
    %c2_48 = arith.constant 2 : index
    %c0_49 = arith.constant 0 : index
    %c0_50 = arith.constant 0 : index
    %58 = vector.load %arg2[%c2_48, %c0_49, %c0_50] : memref<3x8x36xf32, #tpu.memory_space<vmem>>, vector<1x8x36xf32>
    %59 = vector.shape_cast %58 : vector<1x8x36xf32> to vector<8x36xf32>
    %c0_51 = arith.constant 0 : index
    %c128_52 = arith.constant 128 : index
    %60 = vector.load %arg7[%c0_51, %c128_52] : memref<36x640xf32, #tpu.memory_space<vmem>>, vector<36x512xf32>
    %cst_53 = arith.constant dense<0.000000e+00> : vector<8x512xf32>
    %61 = tpu.matmul %59, %60, %cst_53 {dimension_numbers = #tpu.dot_dimension_numbers<[1], [0], [0], [1], [0, 0, 1, 1], [], []>} : vector<8x36xf32>, vector<36x512xf32>, vector<8x512xf32> -> vector<8x512xf32>
    %62 = arith.addf %57, %61 : vector<8x512xf32>
    %cst_54 = arith.constant dense<0.000000e+00> : vector<8xf32>
    %63 = vector.multi_reduction <add>, %62, %cst_54 [1] : vector<8x512xf32> to vector<8xf32>
    %64 = vector.shape_cast %63 : vector<8xf32> to vector<8x1xf32>
    %65 = arith.mulf %62, %62 : vector<8x512xf32>
    %cst_55 = arith.constant dense<0.000000e+00> : vector<8xf32>
    %66 = vector.multi_reduction <add>, %65, %cst_55 [1] : vector<8x512xf32> to vector<8xf32>
    %67 = vector.shape_cast %66 : vector<8xf32> to vector<8x1xf32>
    %cst_56 = arith.constant 0.001953125 : f32
    %68 = vector.broadcast %cst_56 : f32 to vector<8x1xf32>
    %69 = arith.mulf %64, %68 : vector<8x1xf32>
    %cst_57 = arith.constant 0.001953125 : f32
    %70 = vector.broadcast %cst_57 : f32 to vector<8x1xf32>
    %71 = arith.mulf %67, %70 : vector<8x1xf32>
    %72 = arith.mulf %69, %69 : vector<8x1xf32>
    %73 = arith.subf %71, %72 : vector<8x1xf32>
    %74 = vector.broadcast %69 : vector<8x1xf32> to vector<8x512xf32>
    %75 = arith.subf %62, %74 : vector<8x512xf32>
    %cst_58 = arith.constant 9.99999974E-6 : f32
    %76 = vector.broadcast %cst_58 : f32 to vector<8x1xf32>
    %77 = arith.addf %73, %76 : vector<8x1xf32>
    %78 = math.rsqrt %77 : vector<8x1xf32>
    %79 = vector.broadcast %78 : vector<8x1xf32> to vector<8x512xf32>
    %80 = arith.mulf %75, %79 : vector<8x512xf32>
    %cst_59 = arith.constant 0.000000e+00 : f32
    %81 = vector.broadcast %cst_59 : f32 to vector<8x512xf32>
    %82 = arith.maximumf %80, %81 : vector<8x512xf32>
    %cst_60 = arith.constant 0.000000e+00 : f32
    %83 = vector.broadcast %cst_60 : f32 to vector<8x128xf32>
    %c0_61 = arith.constant 0 : index
    %c0_62 = arith.constant 0 : index
    %84 = vector.load %arg8[%c0_61, %c0_62] : memref<8x768xf32, #tpu.memory_space<vmem>>, vector<8x128xf32>
    tpu.vector_store %arg8[%c0_61, %c0_62], %83 {strides = array<i32>} : memref<8x768xf32, #tpu.memory_space<vmem>>, vector<8x128xf32>,
    %cst_63 = arith.constant 0.000000e+00 : f32
    %85 = vector.broadcast %cst_63 : f32 to vector<8x128xf32>
    %c0_64 = arith.constant 0 : index
    %c640_65 = arith.constant 640 : index
    %86 = vector.load %arg8[%c0_64, %c640_65] : memref<8x768xf32, #tpu.memory_space<vmem>>, vector<8x128xf32>
    tpu.vector_store %arg8[%c0_64, %c640_65], %85 {strides = array<i32>} : memref<8x768xf32, #tpu.memory_space<vmem>>, vector<8x128xf32>,
    %c0_66 = arith.constant 0 : index
    %c128_67 = arith.constant 128 : index
    %87 = vector.load %arg8[%c0_66, %c128_67] : memref<8x768xf32, #tpu.memory_space<vmem>>, vector<8x512xf32>
    tpu.vector_store %arg8[%c0_66, %c128_67], %82 {strides = array<i32>} : memref<8x768xf32, #tpu.memory_space<vmem>>, vector<8x512xf32>,
    %c0_68 = arith.constant 0 : index
    %c55_69 = arith.constant 55 : index
    %88 = vector.load %arg8[%c0_68, %c55_69] : memref<8x768xf32, #tpu.memory_space<vmem>>, vector<8x640xf32>
    %89 = vector.broadcast %0 : vector<1x640xf32> to vector<8x640xf32>
    %90 = arith.mulf %88, %89 : vector<8x640xf32>
    %c0_70 = arith.constant 0 : index
    %c0_71 = arith.constant 0 : index
    %91 = vector.load %arg9[%c0_70, %c0_71] : memref<72x640xf32, #tpu.memory_space<vmem>>, vector<8x640xf32>
    tpu.vector_store %arg9[%c0_70, %c0_71], %90 {strides = array<i32>} : memref<72x640xf32, #tpu.memory_space<vmem>>, vector<8x640xf32>,
    %c0_72 = arith.constant 0 : index
    %c56_73 = arith.constant 56 : index
    %92 = vector.load %arg8[%c0_72, %c56_73] : memref<8x768xf32, #tpu.memory_space<vmem>>, vector<8x640xf32>
    %93 = vector.broadcast %1 : vector<1x640xf32> to vector<8x640xf32>
    %94 = arith.mulf %92, %93 : vector<8x640xf32>
    %c8_74 = arith.constant 8 : index
    %c0_75 = arith.constant 0 : index
    %95 = vector.load %arg9[%c8_74, %c0_75] : memref<72x640xf32, #tpu.memory_space<vmem>>, vector<8x640xf32>
    tpu.vector_store %arg9[%c8_74, %c0_75], %94 {strides = array<i32>} : memref<72x640xf32, #tpu.memory_space<vmem>>, vector<8x640xf32>,
    %c0_76 = arith.constant 0 : index
    %c57_77 = arith.constant 57 : index
    %96 = vector.load %arg8[%c0_76, %c57_77] : memref<8x768xf32, #tpu.memory_space<vmem>>, vector<8x640xf32>
    %97 = vector.broadcast %2 : vector<1x640xf32> to vector<8x640xf32>
    %98 = arith.mulf %96, %97 : vector<8x640xf32>
    %c16_78 = arith.constant 16 : index
    %c0_79 = arith.constant 0 : index
    %99 = vector.load %arg9[%c16_78, %c0_79] : memref<72x640xf32, #tpu.memory_space<vmem>>, vector<8x640xf32>
    tpu.vector_store %arg9[%c16_78, %c0_79], %98 {strides = array<i32>} : memref<72x640xf32, #tpu.memory_space<vmem>>, vector<8x640xf32>,
    %c0_80 = arith.constant 0 : index
    %c63_81 = arith.constant 63 : index
    %100 = vector.load %arg8[%c0_80, %c63_81] : memref<8x768xf32, #tpu.memory_space<vmem>>, vector<8x640xf32>
    %101 = vector.broadcast %3 : vector<1x640xf32> to vector<8x640xf32>
    %102 = arith.mulf %100, %101 : vector<8x640xf32>
    %c24_82 = arith.constant 24 : index
    %c0_83 = arith.constant 0 : index
    %103 = vector.load %arg9[%c24_82, %c0_83] : memref<72x640xf32, #tpu.memory_space<vmem>>, vector<8x640xf32>
    tpu.vector_store %arg9[%c24_82, %c0_83], %102 {strides = array<i32>} : memref<72x640xf32, #tpu.memory_space<vmem>>, vector<8x640xf32>,
    %c0_84 = arith.constant 0 : index
    %c64_85 = arith.constant 64 : index
    %104 = vector.load %arg8[%c0_84, %c64_85] : memref<8x768xf32, #tpu.memory_space<vmem>>, vector<8x640xf32>
    %c32_86 = arith.constant 32 : index
    %c0_87 = arith.constant 0 : index
    %105 = vector.load %arg9[%c32_86, %c0_87] : memref<72x640xf32, #tpu.memory_space<vmem>>, vector<8x640xf32>
    tpu.vector_store %arg9[%c32_86, %c0_87], %104 {strides = array<i32>} : memref<72x640xf32, #tpu.memory_space<vmem>>, vector<8x640xf32>,
    %c0_88 = arith.constant 0 : index
    %c65_89 = arith.constant 65 : index
    %106 = vector.load %arg8[%c0_88, %c65_89] : memref<8x768xf32, #tpu.memory_space<vmem>>, vector<8x640xf32>
    %107 = vector.broadcast %4 : vector<1x640xf32> to vector<8x640xf32>
    %108 = arith.mulf %106, %107 : vector<8x640xf32>
    %c40 = arith.constant 40 : index
    %c0_90 = arith.constant 0 : index
    %109 = vector.load %arg9[%c40, %c0_90] : memref<72x640xf32, #tpu.memory_space<vmem>>, vector<8x640xf32>
    tpu.vector_store %arg9[%c40, %c0_90], %108 {strides = array<i32>} : memref<72x640xf32, #tpu.memory_space<vmem>>, vector<8x640xf32>,
    %c0_91 = arith.constant 0 : index
    %c71_92 = arith.constant 71 : index
    %110 = vector.load %arg8[%c0_91, %c71_92] : memref<8x768xf32, #tpu.memory_space<vmem>>, vector<8x640xf32>
    %111 = vector.broadcast %5 : vector<1x640xf32> to vector<8x640xf32>
    %112 = arith.mulf %110, %111 : vector<8x640xf32>
    %c48 = arith.constant 48 : index
    %c0_93 = arith.constant 0 : index
    %113 = vector.load %arg9[%c48, %c0_93] : memref<72x640xf32, #tpu.memory_space<vmem>>, vector<8x640xf32>
    tpu.vector_store %arg9[%c48, %c0_93], %112 {strides = array<i32>} : memref<72x640xf32, #tpu.memory_space<vmem>>, vector<8x640xf32>,
    %c0_94 = arith.constant 0 : index
    %c72_95 = arith.constant 72 : index
    %114 = vector.load %arg8[%c0_94, %c72_95] : memref<8x768xf32, #tpu.memory_space<vmem>>, vector<8x640xf32>
    %115 = vector.broadcast %6 : vector<1x640xf32> to vector<8x640xf32>
    %116 = arith.mulf %114, %115 : vector<8x640xf32>
    %c56_96 = arith.constant 56 : index
    %c0_97 = arith.constant 0 : index
    %117 = vector.load %arg9[%c56_96, %c0_97] : memref<72x640xf32, #tpu.memory_space<vmem>>, vector<8x640xf32>
    tpu.vector_store %arg9[%c56_96, %c0_97], %116 {strides = array<i32>} : memref<72x640xf32, #tpu.memory_space<vmem>>, vector<8x640xf32>,
    %c0_98 = arith.constant 0 : index
    %c73_99 = arith.constant 73 : index
    %118 = vector.load %arg8[%c0_98, %c73_99] : memref<8x768xf32, #tpu.memory_space<vmem>>, vector<8x640xf32>
    %119 = vector.broadcast %7 : vector<1x640xf32> to vector<8x640xf32>
    %120 = arith.mulf %118, %119 : vector<8x640xf32>
    %c64_100 = arith.constant 64 : index
    %c0_101 = arith.constant 0 : index
    %121 = vector.load %arg9[%c64_100, %c0_101] : memref<72x640xf32, #tpu.memory_space<vmem>>, vector<8x640xf32>
    tpu.vector_store %arg9[%c64_100, %c0_101], %120 {strides = array<i32>} : memref<72x640xf32, #tpu.memory_space<vmem>>, vector<8x640xf32>,
    %c0_102 = arith.constant 0 : index
    %c0_103 = arith.constant 0 : index
    %c0_104 = arith.constant 0 : index
    %122 = vector.load %arg3[%c0_102, %c0_103, %c0_104] : memref<3x8x72xf32, #tpu.memory_space<vmem>>, vector<1x8x72xf32>
    %123 = vector.shape_cast %122 : vector<1x8x72xf32> to vector<8x72xf32>
    %c0_105 = arith.constant 0 : index
    %c0_106 = arith.constant 0 : index
    %124 = vector.load %arg9[%c0_105, %c0_106] : memref<72x640xf32, #tpu.memory_space<vmem>>, vector<72x512xf32>
    %cst_107 = arith.constant dense<0.000000e+00> : vector<8x512xf32>
    %125 = tpu.matmul %123, %124, %cst_107 {dimension_numbers = #tpu.dot_dimension_numbers<[1], [0], [0], [1], [0, 0, 1, 1], [], []>} : vector<8x72xf32>, vector<72x512xf32>, vector<8x512xf32> -> vector<8x512xf32>
    %c1_108 = arith.constant 1 : index
    %c0_109 = arith.constant 0 : index
    %c0_110 = arith.constant 0 : index
    %126 = vector.load %arg3[%c1_108, %c0_109, %c0_110] : memref<3x8x72xf32, #tpu.memory_space<vmem>>, vector<1x8x72xf32>
    %127 = vector.shape_cast %126 : vector<1x8x72xf32> to vector<8x72xf32>
    %c0_111 = arith.constant 0 : index
    %c64_112 = arith.constant 64 : index
    %128 = vector.load %arg9[%c0_111, %c64_112] : memref<72x640xf32, #tpu.memory_space<vmem>>, vector<72x512xf32>
    %cst_113 = arith.constant dense<0.000000e+00> : vector<8x512xf32>
    %129 = tpu.matmul %127, %128, %cst_113 {dimension_numbers = #tpu.dot_dimension_numbers<[1], [0], [0], [1], [0, 0, 1, 1], [], []>} : vector<8x72xf32>, vector<72x512xf32>, vector<8x512xf32> -> vector<8x512xf32>
    %130 = arith.addf %125, %129 : vector<8x512xf32>
    %c2_114 = arith.constant 2 : index
    %c0_115 = arith.constant 0 : index
    %c0_116 = arith.constant 0 : index
    %131 = vector.load %arg3[%c2_114, %c0_115, %c0_116] : memref<3x8x72xf32, #tpu.memory_space<vmem>>, vector<1x8x72xf32>
    %132 = vector.shape_cast %131 : vector<1x8x72xf32> to vector<8x72xf32>
    %c0_117 = arith.constant 0 : index
    %c128_118 = arith.constant 128 : index
    %133 = vector.load %arg9[%c0_117, %c128_118] : memref<72x640xf32, #tpu.memory_space<vmem>>, vector<72x512xf32>
    %cst_119 = arith.constant dense<0.000000e+00> : vector<8x512xf32>
    %134 = tpu.matmul %132, %133, %cst_119 {dimension_numbers = #tpu.dot_dimension_numbers<[1], [0], [0], [1], [0, 0, 1, 1], [], []>} : vector<8x72xf32>, vector<72x512xf32>, vector<8x512xf32> -> vector<8x512xf32>
    %135 = arith.addf %130, %134 : vector<8x512xf32>
    %cst_120 = arith.constant dense<0.000000e+00> : vector<8xf32>
    %136 = vector.multi_reduction <add>, %135, %cst_120 [1] : vector<8x512xf32> to vector<8xf32>
    %137 = vector.shape_cast %136 : vector<8xf32> to vector<8x1xf32>
    %138 = arith.mulf %135, %135 : vector<8x512xf32>
    %cst_121 = arith.constant dense<0.000000e+00> : vector<8xf32>
    %139 = vector.multi_reduction <add>, %138, %cst_121 [1] : vector<8x512xf32> to vector<8xf32>
    %140 = vector.shape_cast %139 : vector<8xf32> to vector<8x1xf32>
    %cst_122 = arith.constant 0.001953125 : f32
    %141 = vector.broadcast %cst_122 : f32 to vector<8x1xf32>
    %142 = arith.mulf %137, %141 : vector<8x1xf32>
    %cst_123 = arith.constant 0.001953125 : f32
    %143 = vector.broadcast %cst_123 : f32 to vector<8x1xf32>
    %144 = arith.mulf %140, %143 : vector<8x1xf32>
    %145 = arith.mulf %142, %142 : vector<8x1xf32>
    %146 = arith.subf %144, %145 : vector<8x1xf32>
    %147 = vector.broadcast %142 : vector<8x1xf32> to vector<8x512xf32>
    %148 = arith.subf %135, %147 : vector<8x512xf32>
    %cst_124 = arith.constant 9.99999974E-6 : f32
    %149 = vector.broadcast %cst_124 : f32 to vector<8x1xf32>
    %150 = arith.addf %146, %149 : vector<8x1xf32>
    %151 = math.rsqrt %150 : vector<8x1xf32>
    %152 = vector.broadcast %151 : vector<8x1xf32> to vector<8x512xf32>
    %153 = arith.mulf %148, %152 : vector<8x512xf32>
    %cst_125 = arith.constant 0.000000e+00 : f32
    %154 = vector.broadcast %cst_125 : f32 to vector<8x512xf32>
    %155 = arith.maximumf %153, %154 : vector<8x512xf32>
    %c0_126 = arith.constant 0 : index
    %c0_127 = arith.constant 0 : index
    %c0_128 = arith.constant 0 : index
    %156 = vector.load %arg5[%c0_126, %c0_127, %c0_128] : memref<1x8x512xf32, #tpu.memory_space<vmem>>, vector<1x8x512xf32>
    %157 = vector.shape_cast %156 : vector<1x8x512xf32> to vector<8x512xf32>
    %158 = vector.shape_cast %155 : vector<8x512xf32> to vector<1x8x512xf32>
    tpu.vector_store %arg5[%c0_126, %c0_127, %c0_128], %158 {strides = array<i32>} : memref<1x8x512xf32, #tpu.memory_space<vmem>>, vector<1x8x512xf32>,
    return
  }
  func.func @transform_0(%arg0: i32) -> (i32, i32, i32) {
    %c0_i32 = arith.constant 0 : i32
    %c0_i32_0 = arith.constant 0 : i32
    %c0_i32_1 = arith.constant 0 : i32
    return %arg0, %c0_i32, %c0_i32_0 : i32, i32, i32
  }
  func.func @transform_1(%arg0: i32) -> (i32, i32, i32) {
    %c0_i32 = arith.constant 0 : i32
    %c0_i32_0 = arith.constant 0 : i32
    %c0_i32_1 = arith.constant 0 : i32
    %c0_i32_2 = arith.constant 0 : i32
    return %c0_i32, %c0_i32_0, %c0_i32_1 : i32, i32, i32
  }
  func.func @transform_2(%arg0: i32) -> (i32, i32, i32) {
    %c0_i32 = arith.constant 0 : i32
    %c0_i32_0 = arith.constant 0 : i32
    %c0_i32_1 = arith.constant 0 : i32
    %c0_i32_2 = arith.constant 0 : i32
    return %c0_i32, %c0_i32_0, %c0_i32_1 : i32, i32, i32
  }
  func.func @transform_3(%arg0: i32) -> (i32, i32) {
    %c0_i32 = arith.constant 0 : i32
    %c0_i32_0 = arith.constant 0 : i32
    %c0_i32_1 = arith.constant 0 : i32
    return %c0_i32, %c0_i32_0 : i32, i32
  }
  func.func @transform_4(%arg0: i32) -> (i32, i32, i32) {
    %c0_i32 = arith.constant 0 : i32
    %c0_i32_0 = arith.constant 0 : i32
    %c0_i32_1 = arith.constant 0 : i32
    return %arg0, %c0_i32, %c0_i32_0 : i32, i32, i32
  }
}

</mosaic_0001>

<llo_original>
// kernel: down_conv_block.1
$region0: #{down_conv_block.1}
  #allocation0 [shape = 'u32[]', space=smem, size = 0x4, offset = 0x4, fixed_abs, tag = 'smem constant byte address 0x4 - core index']
  #allocation1 [shape = 'u32[144,128]{1,0:T(1,128)}', space=vmem, size = 0x12000, scoped, tag = 'internal scratch']
  #allocation2 [shape = 'f32[4,768]{1,0:T(4,128)}', space=vmem, size = 0x3000, scoped, tag = 'scratch operand']
  #allocation3 [shape = 'f32[36,640]{1,0:T(8,128)}', space=vmem, size = 0x19000, scoped, tag = 'scratch operand']
  #allocation4 [shape = 'f32[8,768]{1,0:T(8,128)}', space=vmem, size = 0x6000, scoped, tag = 'scratch operand']
  #allocation5 [shape = 'f32[72,640]{1,0:T(8,128)}', space=vmem, size = 0x2d000, scoped, tag = 'scratch operand']
  %s0 = inlined_call_operand.vmem [shape: f32[2,4,512], index: 0, kind: input, shape index: {}]
  %s1 = inlined_call_operand.vmem [shape: f32[3,8,36], index: 1, kind: input, shape index: {}]
  %s2 = inlined_call_operand.vmem [shape: f32[3,8,72], index: 2, kind: input, shape index: {}]
  %s3 = inlined_call_operand.vmem [shape: f32[9,640], index: 3, kind: input, shape index: {}]
  %s4 = inlined_call_operand.vmem [shape: f32[2,8,512], index: 4, kind: output, shape index: {}]
  %s5 = sld [smem:[#allocation0]]
  $region49: #{down_conv_block.1} parent=0
    _
  %s7 = ssub.s32 1, %s5
  %s8 = scalar_select 0, %s7, %s5
  loop: start=0, step=1, limit=4
  $region2: #{down_conv_block.1} parent=0 // loop_pre_header
    _
  $region3: #{down_conv_block.1} parent=0 // loop_header
    %s10 = sphi 0, %s14
    %p11 = scmp.ge.s32.totalorder %s10, 4
    %s20 = sphi 0, %s22
    %s23 = sphi 0, %s20
    %s24 = sphi 0, %s23
    %s40 = sphi 0, %s24
    %s44 = sphi 0, %s44
    %s46 = sphi 0, %s44
    %s47 = sphi 0, %s46
    %s61 = sphi 0, %s47
    %s65 = sphi 0, %s65
    %s67 = sphi 0, %s65
    %s68 = sphi 0, %s67
    %s82 = sphi 0, %s68
    %s86 = sphi 0, %s86
    %s88 = sphi 0, %s86
    %s89 = sphi 0, %s88
    %s103 = sphi 0, %s89
    %s109 = sphi 0, %s111
    %s112 = sphi 0, %s109
    %s113 = sphi 0, %s112
    %s129 = sphi 0, %s113
  $region4: #{down_conv_block.1} parent=0 // loop_header_branch
    %13 = sbr.rel (%p11) target = $region8
  $region5: #{down_conv_block.1} parent=0 // loop_body
    %s15 = ssub.s32 %s10, 1
    %s16 = ssub.s32 %s10, 2
    %s17 = sadd.s32 %s10, 1
    %s18 = ssub.s32 %s10, %s17
    %p19 = scmp.eq.s32.totalorder %s18, 0
    %s21 = sadd.s32 %s20, 1
    %s22 = scalar_select %p19, %s20, %s21
    %p25 = pneg %p19
    %p26 = scmp.eq.s32.totalorder %s10, 1
    %p27 = por %p25, %p26
    %p28 = scmp.ne.s32.totalorder %s20, %s23
    %p29 = scmp.eq.s32.totalorder %s10, 0
    %p30 = por %p28, %p29
    %p31 = scmp.ne.s32.totalorder %s20, %s23
    %p32 = scmp.eq.s32.totalorder %s15, 1
    %p33 = por %p31, %p32
    %p34 = scmp.ne.s32.totalorder %s23, %s24
    %p35 = scmp.eq.s32.totalorder %s15, 0
    %p36 = por %p34, %p35
    %p37 = scmp.ne.s32.totalorder %s23, %s24
    %p38 = scmp.eq.s32.totalorder %s16, 1
    %p39 = por %p37, %p38
    %p41 = scmp.ne.s32.totalorder %s24, %s40
    %p42 = scmp.eq.s32.totalorder %s16, 0
    %p43 = por %p41, %p42
    %s45 = sadd.s32 %s44, 1
    %p48 = scmp.eq.s32.totalorder %s10, 1
    %p49 = scmp.ne.s32.totalorder %s44, %s46
    %p50 = scmp.eq.s32.totalorder %s10, 0
    %p51 = por %p49, %p50
    %p52 = scmp.ne.s32.totalorder %s44, %s46
    %p53 = scmp.eq.s32.totalorder %s15, 1
    %p54 = por %p52, %p53
    %p55 = scmp.ne.s32.totalorder %s46, %s47
    %p56 = scmp.eq.s32.totalorder %s15, 0
    %p57 = por %p55, %p56
    %p58 = scmp.ne.s32.totalorder %s46, %s47
    %p59 = scmp.eq.s32.totalorder %s16, 1
    %p60 = por %p58, %p59
    %p62 = scmp.ne.s32.totalorder %s47, %s61
    %p63 = scmp.eq.s32.totalorder %s16, 0
    %p64 = por %p62, %p63
    %s66 = sadd.s32 %s65, 1
    %p69 = scmp.eq.s32.totalorder %s10, 1
    %p70 = scmp.ne.s32.totalorder %s65, %s67
    %p71 = scmp.eq.s32.totalorder %s10, 0
    %p72 = por %p70, %p71
    %p73 = scmp.ne.s32.totalorder %s65, %s67
    %p74 = scmp.eq.s32.totalorder %s15, 1
    %p75 = por %p73, %p74
    %p76 = scmp.ne.s32.totalorder %s67, %s68
    %p77 = scmp.eq.s32.totalorder %s15, 0
    %p78 = por %p76, %p77
    %p79 = scmp.ne.s32.totalorder %s67, %s68
    %p80 = scmp.eq.s32.totalorder %s16, 1
    %p81 = por %p79, %p80
    %p83 = scmp.ne.s32.totalorder %s68, %s82
    %p84 = scmp.eq.s32.totalorder %s16, 0
    %p85 = por %p83, %p84
    %s87 = sadd.s32 %s86, 1
    %p90 = scmp.eq.s32.totalorder %s10, 1
    %p91 = scmp.ne.s32.totalorder %s86, %s88
    %p92 = scmp.eq.s32.totalorder %s10, 0
    %p93 = por %p91, %p92
    %p94 = scmp.ne.s32.totalorder %s86, %s88
    %p95 = scmp.eq.s32.totalorder %s15, 1
    %p96 = por %p94, %p95
    %p97 = scmp.ne.s32.totalorder %s88, %s89
    %p98 = scmp.eq.s32.totalorder %s15, 0
    %p99 = por %p97, %p98
    %p100 = scmp.ne.s32.totalorder %s88, %s89
    %p101 = scmp.eq.s32.totalorder %s16, 1
    %p102 = por %p100, %p101
    %p104 = scmp.ne.s32.totalorder %s89, %s103
    %p105 = scmp.eq.s32.totalorder %s16, 0
    %p106 = por %p104, %p105
    %s107 = ssub.s32 %s10, %s17
    %p108 = scmp.eq.s32.totalorder %s107, 0
    %s110 = sadd.s32 %s109, 1
    %s111 = scalar_select %p108, %s109, %s110
    %p114 = pneg %p108
    %p115 = scmp.eq.s32.totalorder %s10, 1
    %p116 = por %p114, %p115
    %p117 = scmp.ne.s32.totalorder %s109, %s112
    %p118 = scmp.eq.s32.totalorder %s10, 0
    %p119 = por %p117, %p118
    %p120 = scmp.ne.s32.totalorder %s109, %s112
    %p121 = scmp.eq.s32.totalorder %s15, 1
    %p122 = por %p120, %p121
    %p123 = scmp.ne.s32.totalorder %s112, %s113
    %p124 = scmp.eq.s32.totalorder %s15, 0
    %p125 = por %p123, %p124
    %p126 = scmp.ne.s32.totalorder %s112, %s113
    %p127 = scmp.eq.s32.totalorder %s16, 1
    %p128 = por %p126, %p127
    %p130 = scmp.ne.s32.totalorder %s113, %s129
    %p131 = scmp.eq.s32.totalorder %s16, 0
    %p132 = por %p130, %p131
    %p133 = scmp.le.s32.totalorder 1, %s10
    %p134 = scmp.lt.s32.totalorder %s10, 3
    %p135 = pnand %p133, %p134
    %p136 = pneg %p135
    // Predicated region
    $region9: #{down_conv_block.1} parent=5 // pred_check
      _
    $region10: #{down_conv_block.1} parent=5 // pred_check_branch
      %138 = sbr.rel (%p135) target = $region12
    $region11: #{down_conv_block.1} parent=5 // pred_region
      %s139 = ssub.s32 %s10, 1
      // Predicated region
      $region13: #{down_conv_block.1} parent=11 // pred_check
        %p140 = pneg %p57
      $region14: #{down_conv_block.1} parent=11 // pred_check_branch
        %142 = sbr.rel (%p140) target = $region16
      $region15: #{down_conv_block.1} parent=11 // pred_region
        _
      $region16: #{down_conv_block.1} parent=11 // pred_fallthru
        _
      // Predicated region
      $region17: #{down_conv_block.1} parent=11 // pred_check
        %p143 = pneg %p78
      $region18: #{down_conv_block.1} parent=11 // pred_check_branch
        %145 = sbr.rel (%p143) target = $region20
      $region19: #{down_conv_block.1} parent=11 // pred_region
        _
      $region20: #{down_conv_block.1} parent=11 // pred_fallthru
        _
      // Predicated region
      $region21: #{down_conv_block.1} parent=11 // pred_check
        %p146 = pneg %p99
      $region22: #{down_conv_block.1} parent=11 // pred_check_branch
        %148 = sbr.rel (%p146) target = $region24
      $region23: #{down_conv_block.1} parent=11 // pred_region
        _
      $region24: #{down_conv_block.1} parent=11 // pred_fallthru
        _
    $region12: #{down_conv_block.1} parent=5 // pred_fallthru
      _
    %p149 = scmp.lt.s32.totalorder %s10, 2
    // Predicated region
    $region25: #{down_conv_block.1} parent=5 // pred_check
      %p150 = pneg %p149
    $region26: #{down_conv_block.1} parent=5 // pred_check_branch
      %152 = sbr.rel (%p150) target = $region28
    $region27: #{down_conv_block.1} parent=5 // pred_region
      // Predicated region
      $region29: #{down_conv_block.1} parent=27 // pred_check
        %p153 = pneg %p30
      $region30: #{down_conv_block.1} parent=27 // pred_check_branch
        %155 = sbr.rel (%p153) target = $region32
      $region31: #{down_conv_block.1} parent=27 // pred_region
        %p156 = scmp.lt.s32.totalorder %s10, 1
        %s157 = scalar_select %p156, %s10, 1
        %s158 = smul.addr %s157, 4
        %s159 = smul.addr %s158, 4
        %s160 = scalar_lea.vmem %s0, %s159
      $region32: #{down_conv_block.1} parent=27 // pred_fallthru
        _
    $region28: #{down_conv_block.1} parent=5 // pred_fallthru
      _
    %p161 = scmp.le.s32.totalorder 1, %s10
    %p162 = scmp.lt.s32.totalorder %s10, 3
    %p163 = pnand %p161, %p162
    %p164 = pneg %p163
    // Predicated region
    $region33: #{down_conv_block.1} parent=5 // pred_check
      _
    $region34: #{down_conv_block.1} parent=5 // pred_check_branch
      %166 = sbr.rel (%p163) target = $region36
    $region35: #{down_conv_block.1} parent=5 // pred_region
      %s167 = ssub.s32 %s10, 1
      %p168 = scmp.lt.s32.totalorder %s15, 1
      %s169 = scalar_select %p168, %s15, 1
      %s170 = smul.addr %s169, 4
      %s171 = smul.addr %s170, 4
      %s172 = scalar_lea.vmem %s0, %s171
      %p173 = pneg %p36
      %p174 = pneg %p33
      %p175 = pneg %p57
      %p176 = pneg %p54
      %p177 = pneg %p78
      %p178 = pneg %p75
      %p179 = pneg %p99
      %p180 = pneg %p96
      %p181 = pneg %p125
      %p182 = pneg %p122
      %p183 = scmp.lt.s32.totalorder %s15, 1
      %s184 = scalar_select %p183, %s15, 1
      %s185 = smul.addr %s184, 4
      %s186 = smul.addr %s185, 8
      %s187 = scalar_lea.vmem %s4, %s186
      %p188 = scmp.lt.s32.totalorder %s15, 1
      %s189 = scalar_select %p188, %s15, 1
      %s190 = smul.addr %s189, 4
      %s191 = smul.addr %s190, 4
      %s192 = scalar_lea.vmem %s0, %s191
      %p193 = scmp.lt.s32.totalorder %s15, 1
      %s194 = scalar_select %p193, %s15, 1
      %s195 = smul.addr %s194, 4
      %s196 = smul.addr %s195, 8
      %s197 = scalar_lea.vmem %s4, %s196
      %v198 = vld [vmem:[%s3] ss:$8 sm:$0xf]
      %v199 = vld [vmem:[%s3] ss:$8 sm:$0x10]
      %v200 = vor.u32 %v198, %v199
      %s201 = scalar_lea.vmem %s3, 1
      %v202 = vld [vmem:[%s201] ss:$8 sm:$0xf]
      %v203 = vld [vmem:[%s201] ss:$8 sm:$0x10]
      %v204 = vor.u32 %v202, %v203
      %s205 = scalar_lea.vmem %s3, 2
      %v206 = vld [vmem:[%s205] ss:$8 sm:$0xf]
      %v207 = vld [vmem:[%s205] ss:$8 sm:$0x10]
      %v208 = vor.u32 %v206, %v207
      %s209 = scalar_lea.vmem %s3, 3
      %v210 = vld [vmem:[%s209] ss:$8 sm:$0xf]
      %v211 = vld [vmem:[%s209] ss:$8 sm:$0x10]
      %v212 = vor.u32 %v210, %v211
      %s213 = scalar_lea.vmem %s3, 5
      %v214 = vld [vmem:[%s213] ss:$8 sm:$0xf]
      %v215 = vld [vmem:[%s213] ss:$8 sm:$0x10]
      %v216 = vor.u32 %v214, %v215
      %s217 = scalar_lea.vmem %s3, 6
      %v218 = vld [vmem:[%s217] ss:$8 sm:$0xf]
      %v219 = vld [vmem:[%s217] ss:$8 sm:$0x10]
      %v220 = vor.u32 %v218, %v219
      %s221 = scalar_lea.vmem %s3, 7
      %v222 = vld [vmem:[%s221] ss:$8 sm:$0xf]
      %v223 = vld [vmem:[%s221] ss:$8 sm:$0x10]
      %v224 = vor.u32 %v222, %v223
      %s225 = scalar_lea.vmem %s3, 40
      %v226 = vld [vmem:[%s225] ss:$8 sm:$0xf]
      %v227 = vld [vmem:[%s225] ss:$8 sm:$0x10]
      %v228 = vor.u32 %v226, %v227
      %v229 = vld [vmem:[%s192] sm:$0xff]
      %v230 = vld [vmem:[%s192 + $0x8] sm:$0xff]
      %231 = vst [vmem:[#allocation2] sm:$0xf] 0.0
      %232 = vst [vmem:[#allocation2 + $0x14] sm:$0xf] 0.0
      %233 = vst [vmem:[#allocation2 + $0x4] sm:$0xff] %v229
      %234 = vst [vmem:[#allocation2 + $0xc] sm:$0xff] %v230
      %v235 = vld [vmem:[#allocation2] sm:$0xff]
      %v236 = vld [vmem:[#allocation2 + $0x8] sm:$0xff]
      %v237 = vld [vmem:[#allocation2 + $0x10] sm:$0xff]
      %v239 = vlaneseq
      %v240 = vshrl.u32 %v239, 7
      %v241 = vsub.s32 0, %v240
      %v242 = vrot.slane %v200, %v241
      %v243 = vlaneseq
      %v244 = vshrl.u32 %v243, 7
      %v245 = vsub.s32 1, %v244
      %v246 = vrot.slane %v200, %v245
      %v247 = vlaneseq
      %v248 = vshrl.u32 %v247, 7
      %v249 = vsub.s32 2, %v248
      %v250 = vrot.slane %v200, %v249
      %v251 = vlaneseq
      %v252 = vshrl.u32 %v251, 7
      %v253 = vsub.s32 3, %v252
      %v254 = vrot.slane %v200, %v253
      %v255 = vlaneseq
      %v256 = vshrl.u32 %v255, 7
      %v257 = vsub.s32 4, %v256
      %v258 = vrot.slane %v200, %v257
      %v259 = vcombine.low %v242, %v246
      %v260 = vcombine.low %v250, %v254
      %261 = vrot.lane.b32.xlu0 %v259, 55
      %v262 = vpop.permute.xlu0 %261
      %263 = vrot.lane.b32.xlu0 %v260, 55
      %v264 = vpop.permute.xlu0 %263
      %265 = vrot.lane.b32.xlu0 %v258, 55
      %v266 = vpop.permute.xlu0 %265
      %v267 = vrot.slane %v262, 4
      %v268 = vrot.slane %v264, 4
      %v269 = vrot.slane %v266, 4
      %vm270 = vcmask 449536
      %v271 = vsel %vm270, %v267, %v262
      %vm272 = vcmask 1043456
      %v273 = vsel %vm272, %v267, %v268
      %v274 = vsel %vm270, %v273, %v264
      %v275 = vsel %vm272, %v268, %v269
      %v276 = vsel %vm270, %v275, %v266
      %v280 = vmul.f32 %v235, %v271
      %v281 = vmul.f32 %v236, %v274
      %v282 = vmul.f32 %v237, %v276
      %v286 = vcombine.high %v280, %v280
      %v287 = vcombine.high %v281, %v281
      %v288 = vcombine.high %v282, %v282
      %289 = vrot.lane.b32.xlu0 %v280, 73
      %v290 = vpop.permute.xlu0 %289
      %291 = vrot.lane.b32.xlu0 %v286, 73
      %v292 = vpop.permute.xlu0 %291
      %293 = vrot.lane.b32.xlu0 %v281, 73
      %v294 = vpop.permute.xlu0 %293
      %295 = vrot.lane.b32.xlu0 %v287, 73
      %v296 = vpop.permute.xlu0 %295
      %297 = vrot.lane.b32.xlu0 %v282, 73
      %v298 = vpop.permute.xlu0 %297
      %299 = vrot.lane.b32.xlu0 %v288, 73
      %v300 = vpop.permute.xlu0 %299
      %vm301 = vcmask 596992
      %v302 = vsel %vm301, %v290, %v292
      %v303 = vsel %vm301, %v292, %v294
      %v304 = vsel %vm301, %v294, %v296
      %v305 = vsel %vm301, %v296, %v298
      %v306 = vsel %vm301, %v298, %v300
      %312 = vst [vmem:[#allocation3] sm:$0xf] %v302
      %313 = vst [vmem:[#allocation3 + $0x8] sm:$0xf] %v303
      %314 = vst [vmem:[#allocation3 + $0x10] sm:$0xf] %v304
      %315 = vst [vmem:[#allocation3 + $0x18] sm:$0xf] %v305
      %316 = vst [vmem:[#allocation3 + $0x20] sm:$0xf] %v306
      %v317 = vld [vmem:[#allocation2] sm:$0xff]
      %v318 = vld [vmem:[#allocation2 + $0x8] sm:$0xff]
      %v319 = vld [vmem:[#allocation2 + $0x10] sm:$0xff]
      %v321 = vlaneseq
      %v322 = vshrl.u32 %v321, 7
      %v323 = vsub.s32 0, %v322
      %v324 = vrot.slane %v204, %v323
      %v325 = vlaneseq
      %v326 = vshrl.u32 %v325, 7
      %v327 = vsub.s32 1, %v326
      %v328 = vrot.slane %v204, %v327
      %v329 = vlaneseq
      %v330 = vshrl.u32 %v329, 7
      %v331 = vsub.s32 2, %v330
      %v332 = vrot.slane %v204, %v331
      %v333 = vlaneseq
      %v334 = vshrl.u32 %v333, 7
      %v335 = vsub.s32 3, %v334
      %v336 = vrot.slane %v204, %v335
      %v337 = vlaneseq
      %v338 = vshrl.u32 %v337, 7
      %v339 = vsub.s32 4, %v338
      %v340 = vrot.slane %v204, %v339
      %v341 = vcombine.low %v324, %v328
      %v342 = vcombine.low %v332, %v336
      %343 = vrot.lane.b32.xlu0 %v341, 56
      %v344 = vpop.permute.xlu0 %343
      %345 = vrot.lane.b32.xlu0 %v342, 56
      %v346 = vpop.permute.xlu0 %345
      %347 = vrot.lane.b32.xlu0 %v340, 56
      %v348 = vpop.permute.xlu0 %347
      %v349 = vrot.slane %v344, 4
      %v350 = vrot.slane %v346, 4
      %v351 = vrot.slane %v348, 4
      %vm352 = vcmask 457728
      %v353 = vsel %vm352, %v349, %v344
      %v354 = vsel %vm272, %v349, %v350
      %v355 = vsel %vm352, %v354, %v346
      %v356 = vsel %vm272, %v350, %v351
      %v357 = vsel %vm352, %v356, %v348
      %v361 = vmul.f32 %v317, %v353
      %v362 = vmul.f32 %v318, %v355
      %v363 = vmul.f32 %v319, %v357
      %v367 = vcombine.low %v361, %v361
      %v368 = vcombine.low %v362, %v362
      %v369 = vcombine.low %v363, %v363
      %370 = vrot.lane.b32.xlu0 %v367, 72
      %v371 = vpop.permute.xlu0 %370
      %372 = vrot.lane.b32.xlu0 %v361, 72
      %v373 = vpop.permute.xlu0 %372
      %374 = vrot.lane.b32.xlu0 %v368, 72
      %v375 = vpop.permute.xlu0 %374
      %376 = vrot.lane.b32.xlu0 %v362, 72
      %v377 = vpop.permute.xlu0 %376
      %378 = vrot.lane.b32.xlu0 %v369, 72
      %v379 = vpop.permute.xlu0 %378
      %380 = vrot.lane.b32.xlu0 %v363, 72
      %v381 = vpop.permute.xlu0 %380
      %vm382 = vcmask 588800
      %v383 = vsel %vm382, %v371, %v373
      %v384 = vsel %vm382, %v373, %v375
      %v385 = vsel %vm382, %v375, %v377
      %v386 = vsel %vm382, %v377, %v379
      %v387 = vsel %vm382, %v379, %v381
      %393 = vst [vmem:[#allocation3] sm:$0xf0] %v383
      %394 = vst [vmem:[#allocation3 + $0x8] sm:$0xf0] %v384
      %395 = vst [vmem:[#allocation3 + $0x10] sm:$0xf0] %v385
      %396 = vst [vmem:[#allocation3 + $0x18] sm:$0xf0] %v386
      %397 = vst [vmem:[#allocation3 + $0x20] sm:$0xf0] %v387
      %v398 = vld [vmem:[#allocation2] sm:$0xff]
      %v399 = vld [vmem:[#allocation2 + $0x8] sm:$0xff]
      %v400 = vld [vmem:[#allocation2 + $0x10] sm:$0xff]
      %v402 = vlaneseq
      %v403 = vshrl.u32 %v402, 7
      %v404 = vsub.s32 0, %v403
      %v405 = vrot.slane %v208, %v404
      %v406 = vlaneseq
      %v407 = vshrl.u32 %v406, 7
      %v408 = vsub.s32 1, %v407
      %v409 = vrot.slane %v208, %v408
      %v410 = vlaneseq
      %v411 = vshrl.u32 %v410, 7
      %v412 = vsub.s32 2, %v411
      %v413 = vrot.slane %v208, %v412
      %v414 = vlaneseq
      %v415 = vshrl.u32 %v414, 7
      %v416 = vsub.s32 3, %v415
      %v417 = vrot.slane %v208, %v416
      %v418 = vlaneseq
      %v419 = vshrl.u32 %v418, 7
      %v420 = vsub.s32 4, %v419
      %v421 = vrot.slane %v208, %v420
      %v422 = vcombine.low %v405, %v409
      %v423 = vcombine.low %v413, %v417
      %424 = vrot.lane.b32.xlu0 %v422, 57
      %v425 = vpop.permute.xlu0 %424
      %426 = vrot.lane.b32.xlu0 %v423, 57
      %v427 = vpop.permute.xlu0 %426
      %428 = vrot.lane.b32.xlu0 %v421, 57
      %v429 = vpop.permute.xlu0 %428
      %v430 = vrot.slane %v425, 4
      %v431 = vrot.slane %v427, 4
      %v432 = vrot.slane %v429, 4
      %vm433 = vcmask 465920
      %v434 = vsel %vm433, %v430, %v425
      %v435 = vsel %vm272, %v430, %v431
      %v436 = vsel %vm433, %v435, %v427
      %v437 = vsel %vm272, %v431, %v432
      %v438 = vsel %vm433, %v437, %v429
      %v442 = vmul.f32 %v398, %v434
      %v443 = vmul.f32 %v399, %v436
      %v444 = vmul.f32 %v400, %v438
      %v448 = vcombine.high %v442, %v442
      %v449 = vcombine.high %v443, %v443
      %v450 = vcombine.high %v444, %v444
      %451 = vrot.lane.b32.xlu0 %v442, 71
      %v452 = vpop.permute.xlu0 %451
      %453 = vrot.lane.b32.xlu0 %v448, 71
      %v454 = vpop.permute.xlu0 %453
      %455 = vrot.lane.b32.xlu0 %v443, 71
      %v456 = vpop.permute.xlu0 %455
      %457 = vrot.lane.b32.xlu0 %v449, 71
      %v458 = vpop.permute.xlu0 %457
      %459 = vrot.lane.b32.xlu0 %v444, 71
      %v460 = vpop.permute.xlu0 %459
      %461 = vrot.lane.b32.xlu0 %v450, 71
      %v462 = vpop.permute.xlu0 %461
      %vm463 = vcmask 580608
      %v464 = vsel %vm463, %v452, %v454
      %v465 = vsel %vm463, %v454, %v456
      %v466 = vsel %vm463, %v456, %v458
      %v467 = vsel %vm463, %v458, %v460
      %v468 = vsel %vm463, %v460, %v462
      %474 = vst [vmem:[#allocation3 + $0x28] sm:$0xf] %v464
      %475 = vst [vmem:[#allocation3 + $0x30] sm:$0xf] %v465
      %476 = vst [vmem:[#allocation3 + $0x38] sm:$0xf] %v466
      %477 = vst [vmem:[#allocation3 + $0x40] sm:$0xf] %v467
      %478 = vst [vmem:[#allocation3 + $0x48] sm:$0xf] %v468
      %v479 = vld [vmem:[#allocation2] sm:$0xff]
      %v480 = vld [vmem:[#allocation2 + $0x8] sm:$0xff]
      %v481 = vld [vmem:[#allocation2 + $0x10] sm:$0xff]
      %v483 = vlaneseq
      %v484 = vshrl.u32 %v483, 7
      %v485 = vsub.s32 0, %v484
      %v486 = vrot.slane %v212, %v485
      %v487 = vlaneseq
      %v488 = vshrl.u32 %v487, 7
      %v489 = vsub.s32 1, %v488
      %v490 = vrot.slane %v212, %v489
      %v491 = vlaneseq
      %v492 = vshrl.u32 %v491, 7
      %v493 = vsub.s32 2, %v492
      %v494 = vrot.slane %v212, %v493
      %v495 = vlaneseq
      %v496 = vshrl.u32 %v495, 7
      %v497 = vsub.s32 3, %v496
      %v498 = vrot.slane %v212, %v497
      %v499 = vlaneseq
      %v500 = vshrl.u32 %v499, 7
      %v501 = vsub.s32 4, %v500
      %v502 = vrot.slane %v212, %v501
      %v503 = vcombine.low %v486, %v490
      %v504 = vcombine.low %v494, %v498
      %505 = vrot.lane.b32.xlu0 %v503, 63
      %v506 = vpop.permute.xlu0 %505
      %507 = vrot.lane.b32.xlu0 %v504, 63
      %v508 = vpop.permute.xlu0 %507
      %509 = vrot.lane.b32.xlu0 %v502, 63
      %v510 = vpop.permute.xlu0 %509
      %v511 = vrot.slane %v506, 4
      %v512 = vrot.slane %v508, 4
      %v513 = vrot.slane %v510, 4
      %vm514 = vcmask 515072
      %v515 = vsel %vm514, %v511, %v506
      %v516 = vsel %vm272, %v511, %v512
      %v517 = vsel %vm514, %v516, %v508
      %v518 = vsel %vm272, %v512, %v513
      %v519 = vsel %vm514, %v518, %v510
      %v523 = vmul.f32 %v479, %v515
      %v524 = vmul.f32 %v480, %v517
      %v525 = vmul.f32 %v481, %v519
      %v529 = vcombine.low %v523, %v523
      %v530 = vcombine.low %v524, %v524
      %v531 = vcombine.low %v525, %v525
      %532 = vrot.lane.b32.xlu0 %v529, 65
      %v533 = vpop.permute.xlu0 %532
      %534 = vrot.lane.b32.xlu0 %v523, 65
      %v535 = vpop.permute.xlu0 %534
      %536 = vrot.lane.b32.xlu0 %v530, 65
      %v537 = vpop.permute.xlu0 %536
      %538 = vrot.lane.b32.xlu0 %v524, 65
      %v539 = vpop.permute.xlu0 %538
      %540 = vrot.lane.b32.xlu0 %v531, 65
      %v541 = vpop.permute.xlu0 %540
      %542 = vrot.lane.b32.xlu0 %v525, 65
      %v543 = vpop.permute.xlu0 %542
      %vm544 = vcmask 531456
      %v545 = vsel %vm544, %v533, %v535
      %v546 = vsel %vm544, %v535, %v537
      %v547 = vsel %vm544, %v537, %v539
      %v548 = vsel %vm544, %v539, %v541
      %v549 = vsel %vm544, %v541, %v543
      %555 = vst [vmem:[#allocation3 + $0x28] sm:$0xf0] %v545
      %556 = vst [vmem:[#allocation3 + $0x30] sm:$0xf0] %v546
      %557 = vst [vmem:[#allocation3 + $0x38] sm:$0xf0] %v547
      %558 = vst [vmem:[#allocation3 + $0x40] sm:$0xf0] %v548
      %559 = vst [vmem:[#allocation3 + $0x48] sm:$0xf0] %v549
      %v560 = vld [vmem:[#allocation2] sm:$0xff]
      %v561 = vld [vmem:[#allocation2 + $0x8] sm:$0xff]
      %v562 = vld [vmem:[#allocation2 + $0x10] sm:$0xff]
      %v566 = vcombine.high %v560, %v560
      %v567 = vcombine.high %v561, %v561
      %v568 = vcombine.high %v562, %v562
      %569 = vrot.lane.b32.xlu0 %v560, 64
      %v570 = vpop.permute.xlu0 %569
      %571 = vrot.lane.b32.xlu0 %v566, 64
      %v572 = vpop.permute.xlu0 %571
      %573 = vrot.lane.b32.xlu0 %v561, 64
      %v574 = vpop.permute.xlu0 %573
      %575 = vrot.lane.b32.xlu0 %v567, 64
      %v576 = vpop.permute.xlu0 %575
      %577 = vrot.lane.b32.xlu0 %v562, 64
      %v578 = vpop.permute.xlu0 %577
      %579 = vrot.lane.b32.xlu0 %v568, 64
      %v580 = vpop.permute.xlu0 %579
      %vm581 = vcmask 523264
      %v582 = vsel %vm581, %v570, %v572
      %v583 = vsel %vm581, %v572, %v574
      %v584 = vsel %vm581, %v574, %v576
      %v585 = vsel %vm581, %v576, %v578
      %v586 = vsel %vm581, %v578, %v580
      %592 = vst [vmem:[#allocation3 + $0x50] sm:$0xf] %v582
      %593 = vst [vmem:[#allocation3 + $0x58] sm:$0xf] %v583
      %594 = vst [vmem:[#allocation3 + $0x60] sm:$0xf] %v584
      %595 = vst [vmem:[#allocation3 + $0x68] sm:$0xf] %v585
      %596 = vst [vmem:[#allocation3 + $0x70] sm:$0xf] %v586
      %v597 = vld [vmem:[#allocation2] sm:$0xff]
      %v598 = vld [vmem:[#allocation2 + $0x8] sm:$0xff]
      %v599 = vld [vmem:[#allocation2 + $0x10] sm:$0xff]
      %v601 = vlaneseq
      %v602 = vshrl.u32 %v601, 7
      %v603 = vsub.s32 0, %v602
      %v604 = vrot.slane %v216, %v603
      %v605 = vlaneseq
      %v606 = vshrl.u32 %v605, 7
      %v607 = vsub.s32 1, %v606
      %v608 = vrot.slane %v216, %v607
      %v609 = vlaneseq
      %v610 = vshrl.u32 %v609, 7
      %v611 = vsub.s32 2, %v610
      %v612 = vrot.slane %v216, %v611
      %v613 = vlaneseq
      %v614 = vshrl.u32 %v613, 7
      %v615 = vsub.s32 3, %v614
      %v616 = vrot.slane %v216, %v615
      %v617 = vlaneseq
      %v618 = vshrl.u32 %v617, 7
      %v619 = vsub.s32 4, %v618
      %v620 = vrot.slane %v216, %v619
      %v621 = vcombine.low %v604, %v608
      %v622 = vcombine.low %v612, %v616
      %623 = vrot.lane.b32.xlu0 %v621, 65
      %v624 = vpop.permute.xlu0 %623
      %625 = vrot.lane.b32.xlu0 %v622, 65
      %v626 = vpop.permute.xlu0 %625
      %627 = vrot.lane.b32.xlu0 %v620, 65
      %v628 = vpop.permute.xlu0 %627
      %v629 = vrot.slane %v624, 4
      %v630 = vrot.slane %v626, 4
      %v631 = vrot.slane %v628, 4
      %v632 = vsel %vm544, %v629, %v624
      %v633 = vsel %vm272, %v629, %v630
      %v634 = vsel %vm544, %v633, %v626
      %v635 = vsel %vm272, %v630, %v631
      %v636 = vsel %vm544, %v635, %v628
      %v640 = vmul.f32 %v597, %v632
      %v641 = vmul.f32 %v598, %v634
      %v642 = vmul.f32 %v599, %v636
      %v646 = vcombine.low %v640, %v640
      %v647 = vcombine.low %v641, %v641
      %v648 = vcombine.low %v642, %v642
      %649 = vrot.lane.b32.xlu0 %v646, 63
      %v650 = vpop.permute.xlu0 %649
      %651 = vrot.lane.b32.xlu0 %v640, 63
      %v652 = vpop.permute.xlu0 %651
      %653 = vrot.lane.b32.xlu0 %v647, 63
      %v654 = vpop.permute.xlu0 %653
      %655 = vrot.lane.b32.xlu0 %v641, 63
      %v656 = vpop.permute.xlu0 %655
      %657 = vrot.lane.b32.xlu0 %v648, 63
      %v658 = vpop.permute.xlu0 %657
      %659 = vrot.lane.b32.xlu0 %v642, 63
      %v660 = vpop.permute.xlu0 %659
      %v661 = vsel %vm514, %v650, %v652
      %v662 = vsel %vm514, %v652, %v654
      %v663 = vsel %vm514, %v654, %v656
      %v664 = vsel %vm514, %v656, %v658
      %v665 = vsel %vm514, %v658, %v660
      %671 = vst [vmem:[#allocation3 + $0x50] sm:$0xf0] %v661
      %672 = vst [vmem:[#allocation3 + $0x58] sm:$0xf0] %v662
      %673 = vst [vmem:[#allocation3 + $0x60] sm:$0xf0] %v663
      %674 = vst [vmem:[#allocation3 + $0x68] sm:$0xf0] %v664
      %675 = vst [vmem:[#allocation3 + $0x70] sm:$0xf0] %v665
      %v676 = vld [vmem:[#allocation2] sm:$0xff]
      %v677 = vld [vmem:[#allocation2 + $0x8] sm:$0xff]
      %v678 = vld [vmem:[#allocation2 + $0x10] sm:$0xff]
      %v680 = vlaneseq
      %v681 = vshrl.u32 %v680, 7
      %v682 = vsub.s32 0, %v681
      %v683 = vrot.slane %v220, %v682
      %v684 = vlaneseq
      %v685 = vshrl.u32 %v684, 7
      %v686 = vsub.s32 1, %v685
      %v687 = vrot.slane %v220, %v686
      %v688 = vlaneseq
      %v689 = vshrl.u32 %v688, 7
      %v690 = vsub.s32 2, %v689
      %v691 = vrot.slane %v220, %v690
      %v692 = vlaneseq
      %v693 = vshrl.u32 %v692, 7
      %v694 = vsub.s32 3, %v693
      %v695 = vrot.slane %v220, %v694
      %v696 = vlaneseq
      %v697 = vshrl.u32 %v696, 7
      %v698 = vsub.s32 4, %v697
      %v699 = vrot.slane %v220, %v698
      %v700 = vcombine.low %v683, %v687
      %v701 = vcombine.low %v691, %v695
      %702 = vrot.lane.b32.xlu0 %v700, 71
      %v703 = vpop.permute.xlu0 %702
      %704 = vrot.lane.b32.xlu0 %v701, 71
      %v705 = vpop.permute.xlu0 %704
      %706 = vrot.lane.b32.xlu0 %v699, 71
      %v707 = vpop.permute.xlu0 %706
      %v708 = vrot.slane %v703, 4
      %v709 = vrot.slane %v705, 4
      %v710 = vrot.slane %v707, 4
      %v711 = vsel %vm463, %v708, %v703
      %v712 = vsel %vm272, %v708, %v709
      %v713 = vsel %vm463, %v712, %v705
      %v714 = vsel %vm272, %v709, %v710
      %v715 = vsel %vm463, %v714, %v707
      %v719 = vmul.f32 %v676, %v711
      %v720 = vmul.f32 %v677, %v713
      %v721 = vmul.f32 %v678, %v715
      %v725 = vcombine.high %v719, %v719
      %v726 = vcombine.high %v720, %v720
      %v727 = vcombine.high %v721, %v721
      %728 = vrot.lane.b32.xlu0 %v719, 57
      %v729 = vpop.permute.xlu0 %728
      %730 = vrot.lane.b32.xlu0 %v725, 57
      %v731 = vpop.permute.xlu0 %730
      %732 = vrot.lane.b32.xlu0 %v720, 57
      %v733 = vpop.permute.xlu0 %732
      %734 = vrot.lane.b32.xlu0 %v726, 57
      %v735 = vpop.permute.xlu0 %734
      %736 = vrot.lane.b32.xlu0 %v721, 57
      %v737 = vpop.permute.xlu0 %736
      %738 = vrot.lane.b32.xlu0 %v727, 57
      %v739 = vpop.permute.xlu0 %738
      %v740 = vsel %vm433, %v729, %v731
      %v741 = vsel %vm433, %v731, %v733
      %v742 = vsel %vm433, %v733, %v735
      %v743 = vsel %vm433, %v735, %v737
      %v744 = vsel %vm433, %v737, %v739
      %750 = vst [vmem:[#allocation3 + $0x78] sm:$0xf] %v740
      %751 = vst [vmem:[#allocation3 + $0x80] sm:$0xf] %v741
      %752 = vst [vmem:[#allocation3 + $0x88] sm:$0xf] %v742
      %753 = vst [vmem:[#allocation3 + $0x90] sm:$0xf] %v743
      %754 = vst [vmem:[#allocation3 + $0x98] sm:$0xf] %v744
      %v755 = vld [vmem:[#allocation2] sm:$0xff]
      %v756 = vld [vmem:[#allocation2 + $0x8] sm:$0xff]
      %v757 = vld [vmem:[#allocation2 + $0x10] sm:$0xff]
      %v759 = vlaneseq
      %v760 = vshrl.u32 %v759, 7
      %v761 = vsub.s32 0, %v760
      %v762 = vrot.slane %v224, %v761
      %v763 = vlaneseq
      %v764 = vshrl.u32 %v763, 7
      %v765 = vsub.s32 1, %v764
      %v766 = vrot.slane %v224, %v765
      %v767 = vlaneseq
      %v768 = vshrl.u32 %v767, 7
      %v769 = vsub.s32 2, %v768
      %v770 = vrot.slane %v224, %v769
      %v771 = vlaneseq
      %v772 = vshrl.u32 %v771, 7
      %v773 = vsub.s32 3, %v772
      %v774 = vrot.slane %v224, %v773
      %v775 = vlaneseq
      %v776 = vshrl.u32 %v775, 7
      %v777 = vsub.s32 4, %v776
      %v778 = vrot.slane %v224, %v777
      %v779 = vcombine.low %v762, %v766
      %v780 = vcombine.low %v770, %v774
      %781 = vrot.lane.b32.xlu0 %v779, 72
      %v782 = vpop.permute.xlu0 %781
      %783 = vrot.lane.b32.xlu0 %v780, 72
      %v784 = vpop.permute.xlu0 %783
      %785 = vrot.lane.b32.xlu0 %v778, 72
      %v786 = vpop.permute.xlu0 %785
      %v787 = vrot.slane %v782, 4
      %v788 = vrot.slane %v784, 4
      %v789 = vrot.slane %v786, 4
      %v790 = vsel %vm382, %v787, %v782
      %v791 = vsel %vm272, %v787, %v788
      %v792 = vsel %vm382, %v791, %v784
      %v793 = vsel %vm272, %v788, %v789
      %v794 = vsel %vm382, %v793, %v786
      %v798 = vmul.f32 %v755, %v790
      %v799 = vmul.f32 %v756, %v792
      %v800 = vmul.f32 %v757, %v794
      %v804 = vcombine.low %v798, %v798
      %v805 = vcombine.low %v799, %v799
      %v806 = vcombine.low %v800, %v800
      %807 = vrot.lane.b32.xlu0 %v804, 56
      %v808 = vpop.permute.xlu0 %807
      %809 = vrot.lane.b32.xlu0 %v798, 56
      %v810 = vpop.permute.xlu0 %809
      %811 = vrot.lane.b32.xlu0 %v805, 56
      %v812 = vpop.permute.xlu0 %811
      %813 = vrot.lane.b32.xlu0 %v799, 56
      %v814 = vpop.permute.xlu0 %813
      %815 = vrot.lane.b32.xlu0 %v806, 56
      %v816 = vpop.permute.xlu0 %815
      %817 = vrot.lane.b32.xlu0 %v800, 56
      %v818 = vpop.permute.xlu0 %817
      %v819 = vsel %vm352, %v808, %v810
      %v820 = vsel %vm352, %v810, %v812
      %v821 = vsel %vm352, %v812, %v814
      %v822 = vsel %vm352, %v814, %v816
      %v823 = vsel %vm352, %v816, %v818
      %829 = vst [vmem:[#allocation3 + $0x78] sm:$0xf0] %v819
      %830 = vst [vmem:[#allocation3 + $0x80] sm:$0xf0] %v820
      %831 = vst [vmem:[#allocation3 + $0x88] sm:$0xf0] %v821
      %832 = vst [vmem:[#allocation3 + $0x90] sm:$0xf0] %v822
      %833 = vst [vmem:[#allocation3 + $0x98] sm:$0xf0] %v823
      %v834 = vld [vmem:[#allocation2] sm:$0xff]
      %v835 = vld [vmem:[#allocation2 + $0x8] sm:$0xff]
      %v836 = vld [vmem:[#allocation2 + $0x10] sm:$0xff]
      %v838 = vlaneseq
      %v839 = vshrl.u32 %v838, 7
      %v840 = vsub.s32 0, %v839
      %v841 = vrot.slane %v228, %v840
      %v842 = vlaneseq
      %v843 = vshrl.u32 %v842, 7
      %v844 = vsub.s32 1, %v843
      %v845 = vrot.slane %v228, %v844
      %v846 = vlaneseq
      %v847 = vshrl.u32 %v846, 7
      %v848 = vsub.s32 2, %v847
      %v849 = vrot.slane %v228, %v848
      %v850 = vlaneseq
      %v851 = vshrl.u32 %v850, 7
      %v852 = vsub.s32 3, %v851
      %v853 = vrot.slane %v228, %v852
      %v854 = vlaneseq
      %v855 = vshrl.u32 %v854, 7
      %v856 = vsub.s32 4, %v855
      %v857 = vrot.slane %v228, %v856
      %v858 = vcombine.low %v841, %v845
      %v859 = vcombine.low %v849, %v853
      %860 = vrot.lane.b32.xlu0 %v858, 73
      %v861 = vpop.permute.xlu0 %860
      %862 = vrot.lane.b32.xlu0 %v859, 73
      %v863 = vpop.permute.xlu0 %862
      %864 = vrot.lane.b32.xlu0 %v857, 73
      %v865 = vpop.permute.xlu0 %864
      %v866 = vrot.slane %v861, 4
      %v867 = vrot.slane %v863, 4
      %v868 = vrot.slane %v865, 4
      %v869 = vsel %vm301, %v866, %v861
      %v870 = vsel %vm272, %v866, %v867
      %v871 = vsel %vm301, %v870, %v863
      %v872 = vsel %vm272, %v867, %v868
      %v873 = vsel %vm301, %v872, %v865
      %v877 = vmul.f32 %v834, %v869
      %v878 = vmul.f32 %v835, %v871
      %v879 = vmul.f32 %v836, %v873
      %v883 = vcombine.high %v877, %v877
      %v884 = vcombine.high %v878, %v878
      %v885 = vcombine.high %v879, %v879
      %886 = vrot.lane.b32.xlu0 %v877, 55
      %v887 = vpop.permute.xlu0 %886
      %888 = vrot.lane.b32.xlu0 %v883, 55
      %v889 = vpop.permute.xlu0 %888
      %890 = vrot.lane.b32.xlu0 %v878, 55
      %v891 = vpop.permute.xlu0 %890
      %892 = vrot.lane.b32.xlu0 %v884, 55
      %v893 = vpop.permute.xlu0 %892
      %894 = vrot.lane.b32.xlu0 %v879, 55
      %v895 = vpop.permute.xlu0 %894
      %896 = vrot.lane.b32.xlu0 %v885, 55
      %v897 = vpop.permute.xlu0 %896
      %v898 = vsel %vm270, %v887, %v889
      %v899 = vsel %vm270, %v889, %v891
      %v900 = vsel %vm270, %v891, %v893
      %v901 = vsel %vm270, %v893, %v895
      %v902 = vsel %vm270, %v895, %v897
      %908 = vst [vmem:[#allocation3 + $0xa0] sm:$0xf] %v898
      %909 = vst [vmem:[#allocation3 + $0xa8] sm:$0xf] %v899
      %910 = vst [vmem:[#allocation3 + $0xb0] sm:$0xf] %v900
      %911 = vst [vmem:[#allocation3 + $0xb8] sm:$0xf] %v901
      %912 = vst [vmem:[#allocation3 + $0xc0] sm:$0xf] %v902
      %v913 = vld [vmem:[%s1] sm:$0xff]
      %v914 = vld [vmem:[#allocation3] sm:$0xff]
      %v915 = vld [vmem:[#allocation3 + $0x8] sm:$0xff]
      %v916 = vld [vmem:[#allocation3 + $0x10] sm:$0xff]
      %v917 = vld [vmem:[#allocation3 + $0x18] sm:$0xff]
      %v918 = vld [vmem:[#allocation3 + $0x28] sm:$0xff]
      %v919 = vld [vmem:[#allocation3 + $0x30] sm:$0xff]
      %v920 = vld [vmem:[#allocation3 + $0x38] sm:$0xff]
      %v921 = vld [vmem:[#allocation3 + $0x40] sm:$0xff]
      %v922 = vld [vmem:[#allocation3 + $0x50] sm:$0xff]
      %v923 = vld [vmem:[#allocation3 + $0x58] sm:$0xff]
      %v924 = vld [vmem:[#allocation3 + $0x60] sm:$0xff]
      %v925 = vld [vmem:[#allocation3 + $0x68] sm:$0xff]
      %v926 = vld [vmem:[#allocation3 + $0x78] sm:$0xff]
      %v927 = vld [vmem:[#allocation3 + $0x80] sm:$0xff]
      %v928 = vld [vmem:[#allocation3 + $0x88] sm:$0xff]
      %v929 = vld [vmem:[#allocation3 + $0x90] sm:$0xff]
      %v930 = vld [vmem:[#allocation3 + $0xa0] sm:$0xf]
      %v931 = vld [vmem:[#allocation3 + $0xa8] sm:$0xf]
      %v932 = vld [vmem:[#allocation3 + $0xb0] sm:$0xf]
      %v933 = vld [vmem:[#allocation3 + $0xb8] sm:$0xf]
      %s934 = scalar_lea.vmem %s1, 8
      %v935 = vld [vmem:[%s934] sm:$0xff]
      %v936 = vld [vmem:[#allocation3 + $0x20] sm:$0xff]
      %v937 = vld [vmem:[#allocation3 + $0x48] sm:$0xff]
      %v938 = vld [vmem:[#allocation3 + $0x70] sm:$0xff]
      %v939 = vld [vmem:[#allocation3 + $0x98] sm:$0xff]
      %v940 = vld [vmem:[#allocation3 + $0xc0] sm:$0xf]
      %966 = vrot.lane.b32.xlu0 %v914, 64
      %v967 = vpop.permute.xlu0 %966
      %968 = vrot.lane.b32.xlu0 %v915, 64
      %v969 = vpop.permute.xlu0 %968
      %970 = vrot.lane.b32.xlu0 %v916, 64
      %v971 = vpop.permute.xlu0 %970
      %972 = vrot.lane.b32.xlu0 %v917, 64
      %v973 = vpop.permute.xlu0 %972
      %974 = vrot.lane.b32.xlu0 %v936, 64
      %v975 = vpop.permute.xlu0 %974
      %976 = vrot.lane.b32.xlu0 %v918, 64
      %v977 = vpop.permute.xlu0 %976
      %978 = vrot.lane.b32.xlu0 %v919, 64
      %v979 = vpop.permute.xlu0 %978
      %980 = vrot.lane.b32.xlu0 %v920, 64
      %v981 = vpop.permute.xlu0 %980
      %982 = vrot.lane.b32.xlu0 %v921, 64
      %v983 = vpop.permute.xlu0 %982
      %984 = vrot.lane.b32.xlu0 %v937, 64
      %v985 = vpop.permute.xlu0 %984
      %986 = vrot.lane.b32.xlu0 %v922, 64
      %v987 = vpop.permute.xlu0 %986
      %988 = vrot.lane.b32.xlu0 %v923, 64
      %v989 = vpop.permute.xlu0 %988
      %990 = vrot.lane.b32.xlu0 %v924, 64
      %v991 = vpop.permute.xlu0 %990
      %992 = vrot.lane.b32.xlu0 %v925, 64
      %v993 = vpop.permute.xlu0 %992
      %994 = vrot.lane.b32.xlu0 %v938, 64
      %v995 = vpop.permute.xlu0 %994
      %996 = vrot.lane.b32.xlu0 %v926, 64
      %v997 = vpop.permute.xlu0 %996
      %998 = vrot.lane.b32.xlu0 %v927, 64
      %v999 = vpop.permute.xlu0 %998
      %1000 = vrot.lane.b32.xlu0 %v928, 64
      %v1001 = vpop.permute.xlu0 %1000
      %1002 = vrot.lane.b32.xlu0 %v929, 64
      %v1003 = vpop.permute.xlu0 %1002
      %1004 = vrot.lane.b32.xlu0 %v939, 64
      %v1005 = vpop.permute.xlu0 %1004
      %1006 = vrot.lane.b32.xlu0 %v930, 64
      %v1007 = vpop.permute.xlu0 %1006
      %1008 = vrot.lane.b32.xlu0 %v931, 64
      %v1009 = vpop.permute.xlu0 %1008
      %1010 = vrot.lane.b32.xlu0 %v932, 64
      %v1011 = vpop.permute.xlu0 %1010
      %1012 = vrot.lane.b32.xlu0 %v933, 64
      %v1013 = vpop.permute.xlu0 %1012
      %1014 = vrot.lane.b32.xlu0 %v940, 64
      %v1015 = vpop.permute.xlu0 %1014
      %v1016 = vsel %vm581, %v967, %v969
      %v1017 = vsel %vm581, %v969, %v971
      %v1018 = vsel %vm581, %v971, %v973
      %v1019 = vsel %vm581, %v973, %v975
      %v1020 = vsel %vm581, %v977, %v979
      %v1021 = vsel %vm581, %v979, %v981
      %v1022 = vsel %vm581, %v981, %v983
      %v1023 = vsel %vm581, %v983, %v985
      %v1024 = vsel %vm581, %v987, %v989
      %v1025 = vsel %vm581, %v989, %v991
      %v1026 = vsel %vm581, %v991, %v993
      %v1027 = vsel %vm581, %v993, %v995
      %v1028 = vsel %vm581, %v997, %v999
      %v1029 = vsel %vm581, %v999, %v1001
      %v1030 = vsel %vm581, %v1001, %v1003
      %v1031 = vsel %vm581, %v1003, %v1005
      %v1032 = vsel %vm581, %v1007, %v1009
      %v1033 = vsel %vm581, %v1009, %v1011
      %v1034 = vsel %vm581, %v1011, %v1013
      %v1035 = vsel %vm581, %v1013, %v1015
      %vm1052 = vcmask 293888
      %v1054 = vsel %vm1052, %v935, 0
      %v1056 = vsel %vm272, %v1032, 0
      %v1058 = vsel %vm272, %v1033, 0
      %v1060 = vsel %vm272, %v1034, 0
      %v1062 = vsel %vm272, %v1035, 0
      %1064 = vmatprep.subr.mxu0 0.0
      %1065 = vmatpush1.msra.mxu0 0.0
      %1066 = vmatprep.subr.mxu0 0.0
      %1067 = vmatpush1.msra.mxu0 0.0
      %1068 = vmatprep.subr.mxu0 0.0
      %1069 = vmatpush1.msra.mxu0 0.0
      %1070 = vmatprep.subr.mxu0 0.0
      %1071 = vmatpush1.msra.mxu0 0.0
      %1072 = vmatprep.subr.mxu0 0.0
      %1073 = vmatpush1.msra.mxu0 0.0
      %1074 = vmatprep.subr.mxu0 0.0
      %1075 = vmatpush1.msra.mxu0 0.0
      %1076 = vmatprep.subr.mxu0 0.0
      %1077 = vmatpush1.msra.mxu0 0.0
      %1078 = vmatprep.subr.mxu0 0.0
      %1079 = vmatpush1.msra.mxu0 0.0
      %1080 = vmatprep.subr.mxu0 0.0
      %1081 = vmatpush1.msra.mxu0 0.0
      %1082 = vmatprep.subr.mxu0 0.0
      %1083 = vmatpush1.msra.mxu0 0.0
      %1084 = vmatprep.subr.mxu0 0.0
      %1085 = vmatpush1.msra.mxu0 0.0
      %1086 = vmatprep.subr.mxu0 %v1058
      %1087 = vmatpush1.msra.mxu0 %v1056
      %1088 = vmatprep.subr.mxu0 %v1029
      %1089 = vmatpush1.msra.mxu0 %v1028
      %1090 = vmatprep.subr.mxu0 %v1025
      %1091 = vmatpush1.msra.mxu0 %v1024
      %1092 = vmatprep.subr.mxu0 %v1021
      %1093 = vmatpush1.msra.mxu0 %v1020
      %1094 = vmatprep.subr.mxu0 %v1017
      %1095 = vmatpush1.msra.mxu0 %v1016
      %1096 = vmatprep.subr.mxu0 0.0
      %1097 = vmatpush2.msra.mxu0 0.0
      %1098 = vmatprep.subr.mxu0 0.0
      %1099 = vmatpush2.msra.mxu0 0.0
      %1100 = vmatprep.subr.mxu0 0.0
      %1101 = vmatpush2.msra.mxu0 0.0
      %1102 = vmatprep.subr.mxu0 0.0
      %1103 = vmatpush2.msra.mxu0 0.0
      %1104 = vmatprep.subr.mxu0 0.0
      %1105 = vmatpush2.msra.mxu0 0.0
      %1106 = vmatprep.subr.mxu0 0.0
      %1107 = vmatpush2.msra.mxu0 0.0
      %1108 = vmatprep.subr.mxu0 0.0
      %1109 = vmatpush2.msra.mxu0 0.0
      %1110 = vmatprep.subr.mxu0 0.0
      %1111 = vmatpush2.msra.mxu0 0.0
      %1112 = vmatprep.subr.mxu0 0.0
      %1113 = vmatpush2.msra.mxu0 0.0
      %1114 = vmatprep.subr.mxu0 0.0
      %1115 = vmatpush2.msra.mxu0 0.0
      %1116 = vmatprep.subr.mxu0 0.0
      %1117 = vmatpush2.msra.mxu0 0.0
      %1118 = vmatprep.subr.mxu0 0.0
      %1119 = vmatpush2.msra.mxu0 0.0
      %1120 = vmatprep.subr.mxu0 0.0
      %1121 = vmatpush2.msra.mxu0 0.0
      %1122 = vmatprep.subr.mxu0 0.0
      %1123 = vmatpush2.msra.mxu0 0.0
      %1124 = vmatprep.subr.mxu0 0.0
      %1125 = vmatpush2.msra.mxu0 0.0
      %1126 = vmatprep.subr.mxu0 0.0
      %1127 = vmatpush2.msra.mxu0 0.0
      %1128 = vmatprep.mubr.f32.mxu0 0.0
      %1129 = vmatmul.mubr.f32.gmra.mxu0 %v1054
      %v1130 = vpop.f32.mrf.mxu0
      %v1131 = vadd.f32 0.0, %v1130
      %v1132 = vpop.f32.mrf.mxu0
      %v1133 = vadd.f32 0.0, %v1132
      %1134 = vdwg.mxu0
      %1135 = vmatprep.subr.mxu0 0.0
      %1136 = vmatpush1.msra.mxu0 0.0
      %1137 = vmatprep.subr.mxu0 0.0
      %1138 = vmatpush1.msra.mxu0 0.0
      %1139 = vmatprep.subr.mxu0 0.0
      %1140 = vmatpush1.msra.mxu0 0.0
      %1141 = vmatprep.subr.mxu0 0.0
      %1142 = vmatpush1.msra.mxu0 0.0
      %1143 = vmatprep.subr.mxu0 0.0
      %1144 = vmatpush1.msra.mxu0 0.0
      %1145 = vmatprep.subr.mxu0 0.0
      %1146 = vmatpush1.msra.mxu0 0.0
      %1147 = vmatprep.subr.mxu0 0.0
      %1148 = vmatpush1.msra.mxu0 0.0
      %1149 = vmatprep.subr.mxu0 0.0
      %1150 = vmatpush1.msra.mxu0 0.0
      %1151 = vmatprep.subr.mxu0 0.0
      %1152 = vmatpush1.msra.mxu0 0.0
      %1153 = vmatprep.subr.mxu0 0.0
      %1154 = vmatpush1.msra.mxu0 0.0
      %1155 = vmatprep.subr.mxu0 0.0
      %1156 = vmatpush1.msra.mxu0 0.0
      %1157 = vmatprep.subr.mxu0 %v1062
      %1158 = vmatpush1.msra.mxu0 %v1060
      %1159 = vmatprep.subr.mxu0 %v1031
      %1160 = vmatpush1.msra.mxu0 %v1030
      %1161 = vmatprep.subr.mxu0 %v1027
      %1162 = vmatpush1.msra.mxu0 %v1026
      %1163 = vmatprep.subr.mxu0 %v1023
      %1164 = vmatpush1.msra.mxu0 %v1022
      %1165 = vmatprep.subr.mxu0 %v1019
      %1166 = vmatpush1.msra.mxu0 %v1018
      %1167 = vmatprep.subr.mxu0 0.0
      %1168 = vmatpush2.msra.mxu0 0.0
      %1169 = vmatprep.subr.mxu0 0.0
      %1170 = vmatpush2.msra.mxu0 0.0
      %1171 = vmatprep.subr.mxu0 0.0
      %1172 = vmatpush2.msra.mxu0 0.0
      %1173 = vmatprep.subr.mxu0 0.0
      %1174 = vmatpush2.msra.mxu0 0.0
      %1175 = vmatprep.subr.mxu0 0.0
      %1176 = vmatpush2.msra.mxu0 0.0
      %1177 = vmatprep.subr.mxu0 0.0
      %1178 = vmatpush2.msra.mxu0 0.0
      %1179 = vmatprep.subr.mxu0 0.0
      %1180 = vmatpush2.msra.mxu0 0.0
      %1181 = vmatprep.subr.mxu0 0.0
      %1182 = vmatpush2.msra.mxu0 0.0
      %1183 = vmatprep.subr.mxu0 0.0
      %1184 = vmatpush2.msra.mxu0 0.0
      %1185 = vmatprep.subr.mxu0 0.0
      %1186 = vmatpush2.msra.mxu0 0.0
      %1187 = vmatprep.subr.mxu0 0.0
      %1188 = vmatpush2.msra.mxu0 0.0
      %1189 = vmatprep.subr.mxu0 0.0
      %1190 = vmatpush2.msra.mxu0 0.0
      %1191 = vmatprep.subr.mxu0 0.0
      %1192 = vmatpush2.msra.mxu0 0.0
      %1193 = vmatprep.subr.mxu0 0.0
      %1194 = vmatpush2.msra.mxu0 0.0
      %1195 = vmatprep.subr.mxu0 0.0
      %1196 = vmatpush2.msra.mxu0 0.0
      %1197 = vmatprep.subr.mxu0 0.0
      %1198 = vmatpush2.msra.mxu0 0.0
      %1199 = vmatprep.mubr.f32.mxu0 0.0
      %1200 = vmatmul.mubr.f32.gmra.mxu0 %v1054
      %v1201 = vpop.f32.mrf.mxu0
      %v1202 = vadd.f32 0.0, %v1201
      %v1203 = vpop.f32.mrf.mxu0
      %v1204 = vadd.f32 0.0, %v1203
      %1205 = vdwg.mxu0
      %v1207 = vsel %vm1052, %v913, 0
      %v1209 = vsel %vm272, %v930, 0
      %v1211 = vsel %vm272, %v931, 0
      %v1213 = vsel %vm272, %v932, 0
      %v1215 = vsel %vm272, %v933, 0
      %1217 = vmatprep.subr.mxu0 0.0
      %1218 = vmatpush1.msra.mxu0 0.0
      %1219 = vmatprep.subr.mxu0 0.0
      %1220 = vmatpush1.msra.mxu0 0.0
      %1221 = vmatprep.subr.mxu0 0.0
      %1222 = vmatpush1.msra.mxu0 0.0
      %1223 = vmatprep.subr.mxu0 0.0
      %1224 = vmatpush1.msra.mxu0 0.0
      %1225 = vmatprep.subr.mxu0 0.0
      %1226 = vmatpush1.msra.mxu0 0.0
      %1227 = vmatprep.subr.mxu0 0.0
      %1228 = vmatpush1.msra.mxu0 0.0
      %1229 = vmatprep.subr.mxu0 0.0
      %1230 = vmatpush1.msra.mxu0 0.0
      %1231 = vmatprep.subr.mxu0 0.0
      %1232 = vmatpush1.msra.mxu0 0.0
      %1233 = vmatprep.subr.mxu0 0.0
      %1234 = vmatpush1.msra.mxu0 0.0
      %1235 = vmatprep.subr.mxu0 0.0
      %1236 = vmatpush1.msra.mxu0 0.0
      %1237 = vmatprep.subr.mxu0 0.0
      %1238 = vmatpush1.msra.mxu0 0.0
      %1239 = vmatprep.subr.mxu0 %v1211
      %1240 = vmatpush1.msra.mxu0 %v1209
      %1241 = vmatprep.subr.mxu0 %v927
      %1242 = vmatpush1.msra.mxu0 %v926
      %1243 = vmatprep.subr.mxu0 %v923
      %1244 = vmatpush1.msra.mxu0 %v922
      %1245 = vmatprep.subr.mxu0 %v919
      %1246 = vmatpush1.msra.mxu0 %v918
      %1247 = vmatprep.subr.mxu0 %v915
      %1248 = vmatpush1.msra.mxu0 %v914
      %1249 = vmatprep.subr.mxu0 0.0
      %1250 = vmatpush2.msra.mxu0 0.0
      %1251 = vmatprep.subr.mxu0 0.0
      %1252 = vmatpush2.msra.mxu0 0.0
      %1253 = vmatprep.subr.mxu0 0.0
      %1254 = vmatpush2.msra.mxu0 0.0
      %1255 = vmatprep.subr.mxu0 0.0
      %1256 = vmatpush2.msra.mxu0 0.0
      %1257 = vmatprep.subr.mxu0 0.0
      %1258 = vmatpush2.msra.mxu0 0.0
      %1259 = vmatprep.subr.mxu0 0.0
      %1260 = vmatpush2.msra.mxu0 0.0
      %1261 = vmatprep.subr.mxu0 0.0
      %1262 = vmatpush2.msra.mxu0 0.0
      %1263 = vmatprep.subr.mxu0 0.0
      %1264 = vmatpush2.msra.mxu0 0.0
      %1265 = vmatprep.subr.mxu0 0.0
      %1266 = vmatpush2.msra.mxu0 0.0
      %1267 = vmatprep.subr.mxu0 0.0
      %1268 = vmatpush2.msra.mxu0 0.0
      %1269 = vmatprep.subr.mxu0 0.0
      %1270 = vmatpush2.msra.mxu0 0.0
      %1271 = vmatprep.subr.mxu0 0.0
      %1272 = vmatpush2.msra.mxu0 0.0
      %1273 = vmatprep.subr.mxu0 0.0
      %1274 = vmatpush2.msra.mxu0 0.0
      %1275 = vmatprep.subr.mxu0 0.0
      %1276 = vmatpush2.msra.mxu0 0.0
      %1277 = vmatprep.subr.mxu0 0.0
      %1278 = vmatpush2.msra.mxu0 0.0
      %1279 = vmatprep.subr.mxu0 0.0
      %1280 = vmatpush2.msra.mxu0 0.0
      %1281 = vmatprep.mubr.f32.mxu0 0.0
      %1282 = vmatmul.mubr.f32.gmra.mxu0 %v1207
      %v1283 = vpop.f32.mrf.mxu0
      %v1284 = vadd.f32 %v1131, %v1283
      %v1285 = vpop.f32.mrf.mxu0
      %v1286 = vadd.f32 %v1133, %v1285
      %1287 = vdwg.mxu0
      %1288 = vmatprep.subr.mxu0 0.0
      %1289 = vmatpush1.msra.mxu0 0.0
      %1290 = vmatprep.subr.mxu0 0.0
      %1291 = vmatpush1.msra.mxu0 0.0
      %1292 = vmatprep.subr.mxu0 0.0
      %1293 = vmatpush1.msra.mxu0 0.0
      %1294 = vmatprep.subr.mxu0 0.0
      %1295 = vmatpush1.msra.mxu0 0.0
      %1296 = vmatprep.subr.mxu0 0.0
      %1297 = vmatpush1.msra.mxu0 0.0
      %1298 = vmatprep.subr.mxu0 0.0
      %1299 = vmatpush1.msra.mxu0 0.0
      %1300 = vmatprep.subr.mxu0 0.0
      %1301 = vmatpush1.msra.mxu0 0.0
      %1302 = vmatprep.subr.mxu0 0.0
      %1303 = vmatpush1.msra.mxu0 0.0
      %1304 = vmatprep.subr.mxu0 0.0
      %1305 = vmatpush1.msra.mxu0 0.0
      %1306 = vmatprep.subr.mxu0 0.0
      %1307 = vmatpush1.msra.mxu0 0.0
      %1308 = vmatprep.subr.mxu0 0.0
      %1309 = vmatpush1.msra.mxu0 0.0
      %1310 = vmatprep.subr.mxu0 %v1215
      %1311 = vmatpush1.msra.mxu0 %v1213
      %1312 = vmatprep.subr.mxu0 %v929
      %1313 = vmatpush1.msra.mxu0 %v928
      %1314 = vmatprep.subr.mxu0 %v925
      %1315 = vmatpush1.msra.mxu0 %v924
      %1316 = vmatprep.subr.mxu0 %v921
      %1317 = vmatpush1.msra.mxu0 %v920
      %1318 = vmatprep.subr.mxu0 %v917
      %1319 = vmatpush1.msra.mxu0 %v916
      %1320 = vmatprep.subr.mxu0 0.0
      %1321 = vmatpush2.msra.mxu0 0.0
      %1322 = vmatprep.subr.mxu0 0.0
      %1323 = vmatpush2.msra.mxu0 0.0
      %1324 = vmatprep.subr.mxu0 0.0
      %1325 = vmatpush2.msra.mxu0 0.0
      %1326 = vmatprep.subr.mxu0 0.0
      %1327 = vmatpush2.msra.mxu0 0.0
      %1328 = vmatprep.subr.mxu0 0.0
      %1329 = vmatpush2.msra.mxu0 0.0
      %1330 = vmatprep.subr.mxu0 0.0
      %1331 = vmatpush2.msra.mxu0 0.0
      %1332 = vmatprep.subr.mxu0 0.0
      %1333 = vmatpush2.msra.mxu0 0.0
      %1334 = vmatprep.subr.mxu0 0.0
      %1335 = vmatpush2.msra.mxu0 0.0
      %1336 = vmatprep.subr.mxu0 0.0
      %1337 = vmatpush2.msra.mxu0 0.0
      %1338 = vmatprep.subr.mxu0 0.0
      %1339 = vmatpush2.msra.mxu0 0.0
      %1340 = vmatprep.subr.mxu0 0.0
      %1341 = vmatpush2.msra.mxu0 0.0
      %1342 = vmatprep.subr.mxu0 0.0
      %1343 = vmatpush2.msra.mxu0 0.0
      %1344 = vmatprep.subr.mxu0 0.0
      %1345 = vmatpush2.msra.mxu0 0.0
      %1346 = vmatprep.subr.mxu0 0.0
      %1347 = vmatpush2.msra.mxu0 0.0
      %1348 = vmatprep.subr.mxu0 0.0
      %1349 = vmatpush2.msra.mxu0 0.0
      %1350 = vmatprep.subr.mxu0 0.0
      %1351 = vmatpush2.msra.mxu0 0.0
      %1352 = vmatprep.mubr.f32.mxu0 0.0
      %1353 = vmatmul.mubr.f32.gmra.mxu0 %v1207
      %v1354 = vpop.f32.mrf.mxu0
      %v1355 = vadd.f32 %v1202, %v1354
      %v1356 = vpop.f32.mrf.mxu0
      %v1357 = vadd.f32 %v1204, %v1356
      %1358 = vdwg.mxu0
      %s1359 = scalar_lea.vmem %s1, 16
      %v1360 = vld [vmem:[%s1359] sm:$0xff]
      %v1362 = vsel %vm1052, %v1360, 0
      %v1364 = vsel %vm272, %v940, 0
      %1366 = vmatprep.subr.mxu0 0.0
      %1367 = vmatpush1.msra.mxu0 0.0
      %1368 = vmatprep.subr.mxu0 0.0
      %1369 = vmatpush1.msra.mxu0 0.0
      %1370 = vmatprep.subr.mxu0 0.0
      %1371 = vmatpush1.msra.mxu0 0.0
      %1372 = vmatprep.subr.mxu0 0.0
      %1373 = vmatpush1.msra.mxu0 0.0
      %1374 = vmatprep.subr.mxu0 0.0
      %1375 = vmatpush1.msra.mxu0 0.0
      %1376 = vmatprep.subr.mxu0 0.0
      %1377 = vmatpush1.msra.mxu0 0.0
      %1378 = vmatprep.subr.mxu0 0.0
      %1379 = vmatpush1.msra.mxu0 0.0
      %1380 = vmatprep.subr.mxu0 0.0
      %1381 = vmatpush1.msra.mxu0 0.0
      %1382 = vmatprep.subr.mxu0 0.0
      %1383 = vmatpush1.msra.mxu0 0.0
      %1384 = vmatprep.subr.mxu0 0.0
      %1385 = vmatpush1.msra.mxu0 0.0
      %1386 = vmatprep.subr.mxu0 0.0
      %1387 = vmatpush1.msra.mxu0 0.0
      %1388 = vmatprep.subr.mxu0 %v1213
      %1389 = vmatpush1.msra.mxu0 %v1211
      %1390 = vmatprep.subr.mxu0 %v928
      %1391 = vmatpush1.msra.mxu0 %v927
      %1392 = vmatprep.subr.mxu0 %v924
      %1393 = vmatpush1.msra.mxu0 %v923
      %1394 = vmatprep.subr.mxu0 %v920
      %1395 = vmatpush1.msra.mxu0 %v919
      %1396 = vmatprep.subr.mxu0 %v916
      %1397 = vmatpush1.msra.mxu0 %v915
      %1398 = vmatprep.subr.mxu0 0.0
      %1399 = vmatpush2.msra.mxu0 0.0
      %1400 = vmatprep.subr.mxu0 0.0
      %1401 = vmatpush2.msra.mxu0 0.0
      %1402 = vmatprep.subr.mxu0 0.0
      %1403 = vmatpush2.msra.mxu0 0.0
      %1404 = vmatprep.subr.mxu0 0.0
      %1405 = vmatpush2.msra.mxu0 0.0
      %1406 = vmatprep.subr.mxu0 0.0
      %1407 = vmatpush2.msra.mxu0 0.0
      %1408 = vmatprep.subr.mxu0 0.0
      %1409 = vmatpush2.msra.mxu0 0.0
      %1410 = vmatprep.subr.mxu0 0.0
      %1411 = vmatpush2.msra.mxu0 0.0
      %1412 = vmatprep.subr.mxu0 0.0
      %1413 = vmatpush2.msra.mxu0 0.0
      %1414 = vmatprep.subr.mxu0 0.0
      %1415 = vmatpush2.msra.mxu0 0.0
      %1416 = vmatprep.subr.mxu0 0.0
      %1417 = vmatpush2.msra.mxu0 0.0
      %1418 = vmatprep.subr.mxu0 0.0
      %1419 = vmatpush2.msra.mxu0 0.0
      %1420 = vmatprep.subr.mxu0 0.0
      %1421 = vmatpush2.msra.mxu0 0.0
      %1422 = vmatprep.subr.mxu0 0.0
      %1423 = vmatpush2.msra.mxu0 0.0
      %1424 = vmatprep.subr.mxu0 0.0
      %1425 = vmatpush2.msra.mxu0 0.0
      %1426 = vmatprep.subr.mxu0 0.0
      %1427 = vmatpush2.msra.mxu0 0.0
      %1428 = vmatprep.subr.mxu0 0.0
      %1429 = vmatpush2.msra.mxu0 0.0
      %1430 = vmatprep.mubr.f32.mxu0 0.0
      %1431 = vmatmul.mubr.f32.gmra.mxu0 %v1362
      %v1432 = vpop.f32.mrf.mxu0
      %v1433 = vadd.f32 0.0, %v1432
      %v1434 = vpop.f32.mrf.mxu0
      %v1435 = vadd.f32 0.0, %v1434
      %1436 = vdwg.mxu0
      %1437 = vmatprep.subr.mxu0 0.0
      %1438 = vmatpush1.msra.mxu0 0.0
      %1439 = vmatprep.subr.mxu0 0.0
      %1440 = vmatpush1.msra.mxu0 0.0
      %1441 = vmatprep.subr.mxu0 0.0
      %1442 = vmatpush1.msra.mxu0 0.0
      %1443 = vmatprep.subr.mxu0 0.0
      %1444 = vmatpush1.msra.mxu0 0.0
      %1445 = vmatprep.subr.mxu0 0.0
      %1446 = vmatpush1.msra.mxu0 0.0
      %1447 = vmatprep.subr.mxu0 0.0
      %1448 = vmatpush1.msra.mxu0 0.0
      %1449 = vmatprep.subr.mxu0 0.0
      %1450 = vmatpush1.msra.mxu0 0.0
      %1451 = vmatprep.subr.mxu0 0.0
      %1452 = vmatpush1.msra.mxu0 0.0
      %1453 = vmatprep.subr.mxu0 0.0
      %1454 = vmatpush1.msra.mxu0 0.0
      %1455 = vmatprep.subr.mxu0 0.0
      %1456 = vmatpush1.msra.mxu0 0.0
      %1457 = vmatprep.subr.mxu0 0.0
      %1458 = vmatpush1.msra.mxu0 0.0
      %1459 = vmatprep.subr.mxu0 %v1364
      %1460 = vmatpush1.msra.mxu0 %v1215
      %1461 = vmatprep.subr.mxu0 %v939
      %1462 = vmatpush1.msra.mxu0 %v929
      %1463 = vmatprep.subr.mxu0 %v938
      %1464 = vmatpush1.msra.mxu0 %v925
      %1465 = vmatprep.subr.mxu0 %v937
      %1466 = vmatpush1.msra.mxu0 %v921
      %1467 = vmatprep.subr.mxu0 %v936
      %1468 = vmatpush1.msra.mxu0 %v917
      %1469 = vmatprep.subr.mxu0 0.0
      %1470 = vmatpush2.msra.mxu0 0.0
      %1471 = vmatprep.subr.mxu0 0.0
      %1472 = vmatpush2.msra.mxu0 0.0
      %1473 = vmatprep.subr.mxu0 0.0
      %1474 = vmatpush2.msra.mxu0 0.0
      %1475 = vmatprep.subr.mxu0 0.0
      %1476 = vmatpush2.msra.mxu0 0.0
      %1477 = vmatprep.subr.mxu0 0.0
      %1478 = vmatpush2.msra.mxu0 0.0
      %1479 = vmatprep.subr.mxu0 0.0
      %1480 = vmatpush2.msra.mxu0 0.0
      %1481 = vmatprep.subr.mxu0 0.0
      %1482 = vmatpush2.msra.mxu0 0.0
      %1483 = vmatprep.subr.mxu0 0.0
      %1484 = vmatpush2.msra.mxu0 0.0
      %1485 = vmatprep.subr.mxu0 0.0
      %1486 = vmatpush2.msra.mxu0 0.0
      %1487 = vmatprep.subr.mxu0 0.0
      %1488 = vmatpush2.msra.mxu0 0.0
      %1489 = vmatprep.subr.mxu0 0.0
      %1490 = vmatpush2.msra.mxu0 0.0
      %1491 = vmatprep.subr.mxu0 0.0
      %1492 = vmatpush2.msra.mxu0 0.0
      %1493 = vmatprep.subr.mxu0 0.0
      %1494 = vmatpush2.msra.mxu0 0.0
      %1495 = vmatprep.subr.mxu0 0.0
      %1496 = vmatpush2.msra.mxu0 0.0
      %1497 = vmatprep.subr.mxu0 0.0
      %1498 = vmatpush2.msra.mxu0 0.0
      %1499 = vmatprep.subr.mxu0 0.0
      %1500 = vmatpush2.msra.mxu0 0.0
      %1501 = vmatprep.mubr.f32.mxu0 0.0
      %1502 = vmatmul.mubr.f32.gmra.mxu0 %v1362
      %v1503 = vpop.f32.mrf.mxu0
      %v1504 = vadd.f32 0.0, %v1503
      %v1505 = vpop.f32.mrf.mxu0
      %v1506 = vadd.f32 0.0, %v1505
      %1507 = vdwg.mxu0
      %v1508 = vadd.f32 %v1284, %v1433
      %v1509 = vadd.f32 %v1286, %v1435
      %v1510 = vadd.f32 %v1355, %v1504
      %v1511 = vadd.f32 %v1357, %v1506
      %v1512 = vadd.f32 %v1508, %v1509
      %v1513 = vadd.f32 %v1512, %v1510
      %v1514 = vadd.f32 %v1513, %v1511
      %1515 = vadd.xlane.f32.xlu0 %v1514
      %v1516 = vpop.xlane.xlu0 %1515
      %v1517 = vmul.f32 %v1508, %v1508
      %v1518 = vmul.f32 %v1509, %v1509
      %v1519 = vmul.f32 %v1510, %v1510
      %v1520 = vmul.f32 %v1511, %v1511
      %v1521 = vadd.f32 %v1517, %v1518
      %v1522 = vadd.f32 %v1521, %v1519
      %v1523 = vadd.f32 %v1522, %v1520
      %1524 = vadd.xlane.f32.xlu0 %v1523
      %v1525 = vpop.xlane.xlu0 %1524
      %v1526 = vmul.f32 %v1516, 0.001953125
      %v1527 = vmul.f32 %v1525, 0.001953125
      %v1528 = vmul.f32 %v1526, %v1526
      %v1529 = vsub.f32 %v1527, %v1528
      %v1530 = vsub.f32 %v1508, %v1526
      %v1531 = vsub.f32 %v1509, %v1526
      %v1532 = vsub.f32 %v1510, %v1526
      %v1533 = vsub.f32 %v1511, %v1526
      %v1534 = vadd.f32 %v1529, 1e-05
      %v1535 = vrsqrt.pop %v1534
      %v1536 = vmul.f32 %v1530, %v1535
      %v1537 = vmul.f32 %v1531, %v1535
      %v1538 = vmul.f32 %v1532, %v1535
      %v1539 = vmul.f32 %v1533, %v1535
      %v1540 = vmax.f32 %v1536, 0.0
      %v1541 = vmax.f32 %v1537, 0.0
      %v1542 = vmax.f32 %v1538, 0.0
      %v1543 = vmax.f32 %v1539, 0.0
      %1544 = vst [vmem:[#allocation4] sm:$0xff] 0.0
      %1545 = vst [vmem:[#allocation4 + $0x28] sm:$0xff] 0.0
      %1546 = vst [vmem:[#allocation4 + $0x8] sm:$0xff] %v1540
      %1547 = vst [vmem:[#allocation4 + $0x10] sm:$0xff] %v1541
      %1548 = vst [vmem:[#allocation4 + $0x18] sm:$0xff] %v1542
      %1549 = vst [vmem:[#allocation4 + $0x20] sm:$0xff] %v1543
      %v1550 = vld [vmem:[#allocation4] sm:$0xff]
      %v1551 = vld [vmem:[#allocation4 + $0x8] sm:$0xff]
      %v1552 = vld [vmem:[#allocation4 + $0x10] sm:$0xff]
      %v1553 = vld [vmem:[#allocation4 + $0x18] sm:$0xff]
      %v1554 = vld [vmem:[#allocation4 + $0x20] sm:$0xff]
      %v1555 = vld [vmem:[#allocation4 + $0x28] sm:$0xff]
      %1556 = vrot.lane.b32.xlu0 %v242, 55
      %v1557 = vpop.permute.xlu0 %1556
      %1558 = vrot.lane.b32.xlu0 %v246, 55
      %v1559 = vpop.permute.xlu0 %1558
      %1560 = vrot.lane.b32.xlu0 %v250, 55
      %v1561 = vpop.permute.xlu0 %1560
      %1562 = vrot.lane.b32.xlu0 %v254, 55
      %v1563 = vpop.permute.xlu0 %1562
      %v1564 = vsel %vm270, %v1557, %v1559
      %v1565 = vsel %vm270, %v1559, %v1561
      %v1566 = vsel %vm270, %v1561, %v1563
      %v1567 = vsel %vm270, %v1563, %v266
      %v1574 = vmul.f32 %v1550, %v1557
      %v1575 = vmul.f32 %v1551, %v1564
      %v1576 = vmul.f32 %v1552, %v1565
      %v1577 = vmul.f32 %v1553, %v1566
      %v1578 = vmul.f32 %v1554, %v1567
      %v1579 = vmul.f32 %v1555, %v266
      %1586 = vrot.lane.b32.xlu0 %v1574, 73
      %v1587 = vpop.permute.xlu0 %1586
      %1588 = vrot.lane.b32.xlu0 %v1575, 73
      %v1589 = vpop.permute.xlu0 %1588
      %1590 = vrot.lane.b32.xlu0 %v1576, 73
      %v1591 = vpop.permute.xlu0 %1590
      %1592 = vrot.lane.b32.xlu0 %v1577, 73
      %v1593 = vpop.permute.xlu0 %1592
      %1594 = vrot.lane.b32.xlu0 %v1578, 73
      %v1595 = vpop.permute.xlu0 %1594
      %1596 = vrot.lane.b32.xlu0 %v1579, 73
      %v1597 = vpop.permute.xlu0 %1596
      %v1598 = vsel %vm301, %v1587, %v1589
      %v1599 = vsel %vm301, %v1589, %v1591
      %v1600 = vsel %vm301, %v1591, %v1593
      %v1601 = vsel %vm301, %v1593, %v1595
      %v1602 = vsel %vm301, %v1595, %v1597
      %1608 = vst [vmem:[#allocation5] sm:$0xff] %v1598
      %1609 = vst [vmem:[#allocation5 + $0x8] sm:$0xff] %v1599
      %1610 = vst [vmem:[#allocation5 + $0x10] sm:$0xff] %v1600
      %1611 = vst [vmem:[#allocation5 + $0x18] sm:$0xff] %v1601
      %1612 = vst [vmem:[#allocation5 + $0x20] sm:$0xff] %v1602
      %v1613 = vld [vmem:[#allocation4] sm:$0xff]
      %v1614 = vld [vmem:[#allocation4 + $0x8] sm:$0xff]
      %v1615 = vld [vmem:[#allocation4 + $0x10] sm:$0xff]
      %v1616 = vld [vmem:[#allocation4 + $0x18] sm:$0xff]
      %v1617 = vld [vmem:[#allocation4 + $0x20] sm:$0xff]
      %v1618 = vld [vmem:[#allocation4 + $0x28] sm:$0xff]
      %1619 = vrot.lane.b32.xlu0 %v324, 56
      %v1620 = vpop.permute.xlu0 %1619
      %1621 = vrot.lane.b32.xlu0 %v328, 56
      %v1622 = vpop.permute.xlu0 %1621
      %1623 = vrot.lane.b32.xlu0 %v332, 56
      %v1624 = vpop.permute.xlu0 %1623
      %1625 = vrot.lane.b32.xlu0 %v336, 56
      %v1626 = vpop.permute.xlu0 %1625
      %v1627 = vsel %vm352, %v1620, %v1622
      %v1628 = vsel %vm352, %v1622, %v1624
      %v1629 = vsel %vm352, %v1624, %v1626
      %v1630 = vsel %vm352, %v1626, %v348
      %v1637 = vmul.f32 %v1613, %v1620
      %v1638 = vmul.f32 %v1614, %v1627
      %v1639 = vmul.f32 %v1615, %v1628
      %v1640 = vmul.f32 %v1616, %v1629
      %v1641 = vmul.f32 %v1617, %v1630
      %v1642 = vmul.f32 %v1618, %v348
      %1649 = vrot.lane.b32.xlu0 %v1637, 72
      %v1650 = vpop.permute.xlu0 %1649
      %1651 = vrot.lane.b32.xlu0 %v1638, 72
      %v1652 = vpop.permute.xlu0 %1651
      %1653 = vrot.lane.b32.xlu0 %v1639, 72
      %v1654 = vpop.permute.xlu0 %1653
      %1655 = vrot.lane.b32.xlu0 %v1640, 72
      %v1656 = vpop.permute.xlu0 %1655
      %1657 = vrot.lane.b32.xlu0 %v1641, 72
      %v1658 = vpop.permute.xlu0 %1657
      %1659 = vrot.lane.b32.xlu0 %v1642, 72
      %v1660 = vpop.permute.xlu0 %1659
      %v1661 = vsel %vm382, %v1650, %v1652
      %v1662 = vsel %vm382, %v1652, %v1654
      %v1663 = vsel %vm382, %v1654, %v1656
      %v1664 = vsel %vm382, %v1656, %v1658
      %v1665 = vsel %vm382, %v1658, %v1660
      %1671 = vst [vmem:[#allocation5 + $0x28] sm:$0xff] %v1661
      %1672 = vst [vmem:[#allocation5 + $0x30] sm:$0xff] %v1662
      %1673 = vst [vmem:[#allocation5 + $0x38] sm:$0xff] %v1663
      %1674 = vst [vmem:[#allocation5 + $0x40] sm:$0xff] %v1664
      %1675 = vst [vmem:[#allocation5 + $0x48] sm:$0xff] %v1665
      %v1676 = vld [vmem:[#allocation4] sm:$0xff]
      %v1677 = vld [vmem:[#allocation4 + $0x8] sm:$0xff]
      %v1678 = vld [vmem:[#allocation4 + $0x10] sm:$0xff]
      %v1679 = vld [vmem:[#allocation4 + $0x18] sm:$0xff]
      %v1680 = vld [vmem:[#allocation4 + $0x20] sm:$0xff]
      %v1681 = vld [vmem:[#allocation4 + $0x28] sm:$0xff]
      %1682 = vrot.lane.b32.xlu0 %v405, 57
      %v1683 = vpop.permute.xlu0 %1682
      %1684 = vrot.lane.b32.xlu0 %v409, 57
      %v1685 = vpop.permute.xlu0 %1684
      %1686 = vrot.lane.b32.xlu0 %v413, 57
      %v1687 = vpop.permute.xlu0 %1686
      %1688 = vrot.lane.b32.xlu0 %v417, 57
      %v1689 = vpop.permute.xlu0 %1688
      %v1690 = vsel %vm433, %v1683, %v1685
      %v1691 = vsel %vm433, %v1685, %v1687
      %v1692 = vsel %vm433, %v1687, %v1689
      %v1693 = vsel %vm433, %v1689, %v429
      %v1700 = vmul.f32 %v1676, %v1683
      %v1701 = vmul.f32 %v1677, %v1690
      %v1702 = vmul.f32 %v1678, %v1691
      %v1703 = vmul.f32 %v1679, %v1692
      %v1704 = vmul.f32 %v1680, %v1693
      %v1705 = vmul.f32 %v1681, %v429
      %1712 = vrot.lane.b32.xlu0 %v1700, 71
      %v1713 = vpop.permute.xlu0 %1712
      %1714 = vrot.lane.b32.xlu0 %v1701, 71
      %v1715 = vpop.permute.xlu0 %1714
      %1716 = vrot.lane.b32.xlu0 %v1702, 71
      %v1717 = vpop.permute.xlu0 %1716
      %1718 = vrot.lane.b32.xlu0 %v1703, 71
      %v1719 = vpop.permute.xlu0 %1718
      %1720 = vrot.lane.b32.xlu0 %v1704, 71
      %v1721 = vpop.permute.xlu0 %1720
      %1722 = vrot.lane.b32.xlu0 %v1705, 71
      %v1723 = vpop.permute.xlu0 %1722
      %v1724 = vsel %vm463, %v1713, %v1715
      %v1725 = vsel %vm463, %v1715, %v1717
      %v1726 = vsel %vm463, %v1717, %v1719
      %v1727 = vsel %vm463, %v1719, %v1721
      %v1728 = vsel %vm463, %v1721, %v1723
      %1734 = vst [vmem:[#allocation5 + $0x50] sm:$0xff] %v1724
      %1735 = vst [vmem:[#allocation5 + $0x58] sm:$0xff] %v1725
      %1736 = vst [vmem:[#allocation5 + $0x60] sm:$0xff] %v1726
      %1737 = vst [vmem:[#allocation5 + $0x68] sm:$0xff] %v1727
      %1738 = vst [vmem:[#allocation5 + $0x70] sm:$0xff] %v1728
      %v1739 = vld [vmem:[#allocation4] sm:$0xff]
      %v1740 = vld [vmem:[#allocation4 + $0x8] sm:$0xff]
      %v1741 = vld [vmem:[#allocation4 + $0x10] sm:$0xff]
      %v1742 = vld [vmem:[#allocation4 + $0x18] sm:$0xff]
      %v1743 = vld [vmem:[#allocation4 + $0x20] sm:$0xff]
      %v1744 = vld [vmem:[#allocation4 + $0x28] sm:$0xff]
      %1745 = vrot.lane.b32.xlu0 %v486, 63
      %v1746 = vpop.permute.xlu0 %1745
      %1747 = vrot.lane.b32.xlu0 %v490, 63
      %v1748 = vpop.permute.xlu0 %1747
      %1749 = vrot.lane.b32.xlu0 %v494, 63
      %v1750 = vpop.permute.xlu0 %1749
      %1751 = vrot.lane.b32.xlu0 %v498, 63
      %v1752 = vpop.permute.xlu0 %1751
      %v1753 = vsel %vm514, %v1746, %v1748
      %v1754 = vsel %vm514, %v1748, %v1750
      %v1755 = vsel %vm514, %v1750, %v1752
      %v1756 = vsel %vm514, %v1752, %v510
      %v1763 = vmul.f32 %v1739, %v1746
      %v1764 = vmul.f32 %v1740, %v1753
      %v1765 = vmul.f32 %v1741, %v1754
      %v1766 = vmul.f32 %v1742, %v1755
      %v1767 = vmul.f32 %v1743, %v1756
      %v1768 = vmul.f32 %v1744, %v510
      %1775 = vrot.lane.b32.xlu0 %v1763, 65
      %v1776 = vpop.permute.xlu0 %1775
      %1777 = vrot.lane.b32.xlu0 %v1764, 65
      %v1778 = vpop.permute.xlu0 %1777
      %1779 = vrot.lane.b32.xlu0 %v1765, 65
      %v1780 = vpop.permute.xlu0 %1779
      %1781 = vrot.lane.b32.xlu0 %v1766, 65
      %v1782 = vpop.permute.xlu0 %1781
      %1783 = vrot.lane.b32.xlu0 %v1767, 65
      %v1784 = vpop.permute.xlu0 %1783
      %1785 = vrot.lane.b32.xlu0 %v1768, 65
      %v1786 = vpop.permute.xlu0 %1785
      %v1787 = vsel %vm544, %v1776, %v1778
      %v1788 = vsel %vm544, %v1778, %v1780
      %v1789 = vsel %vm544, %v1780, %v1782
      %v1790 = vsel %vm544, %v1782, %v1784
      %v1791 = vsel %vm544, %v1784, %v1786
      %1797 = vst [vmem:[#allocation5 + $0x78] sm:$0xff] %v1787
      %1798 = vst [vmem:[#allocation5 + $0x80] sm:$0xff] %v1788
      %1799 = vst [vmem:[#allocation5 + $0x88] sm:$0xff] %v1789
      %1800 = vst [vmem:[#allocation5 + $0x90] sm:$0xff] %v1790
      %1801 = vst [vmem:[#allocation5 + $0x98] sm:$0xff] %v1791
      %v1802 = vld [vmem:[#allocation4] sm:$0xff]
      %v1803 = vld [vmem:[#allocation4 + $0x8] sm:$0xff]
      %v1804 = vld [vmem:[#allocation4 + $0x10] sm:$0xff]
      %v1805 = vld [vmem:[#allocation4 + $0x18] sm:$0xff]
      %v1806 = vld [vmem:[#allocation4 + $0x20] sm:$0xff]
      %v1807 = vld [vmem:[#allocation4 + $0x28] sm:$0xff]
      %1814 = vrot.lane.b32.xlu0 %v1802, 64
      %v1815 = vpop.permute.xlu0 %1814
      %1816 = vrot.lane.b32.xlu0 %v1803, 64
      %v1817 = vpop.permute.xlu0 %1816
      %1818 = vrot.lane.b32.xlu0 %v1804, 64
      %v1819 = vpop.permute.xlu0 %1818
      %1820 = vrot.lane.b32.xlu0 %v1805, 64
      %v1821 = vpop.permute.xlu0 %1820
      %1822 = vrot.lane.b32.xlu0 %v1806, 64
      %v1823 = vpop.permute.xlu0 %1822
      %1824 = vrot.lane.b32.xlu0 %v1807, 64
      %v1825 = vpop.permute.xlu0 %1824
      %v1826 = vsel %vm581, %v1815, %v1817
      %v1827 = vsel %vm581, %v1817, %v1819
      %v1828 = vsel %vm581, %v1819, %v1821
      %v1829 = vsel %vm581, %v1821, %v1823
      %v1830 = vsel %vm581, %v1823, %v1825
      %1836 = vst [vmem:[#allocation5 + $0xa0] sm:$0xff] %v1826
      %1837 = vst [vmem:[#allocation5 + $0xa8] sm:$0xff] %v1827
      %1838 = vst [vmem:[#allocation5 + $0xb0] sm:$0xff] %v1828
      %1839 = vst [vmem:[#allocation5 + $0xb8] sm:$0xff] %v1829
      %1840 = vst [vmem:[#allocation5 + $0xc0] sm:$0xff] %v1830
      %v1841 = vld [vmem:[#allocation4] sm:$0xff]
      %v1842 = vld [vmem:[#allocation4 + $0x8] sm:$0xff]
      %v1843 = vld [vmem:[#allocation4 + $0x10] sm:$0xff]
      %v1844 = vld [vmem:[#allocation4 + $0x18] sm:$0xff]
      %v1845 = vld [vmem:[#allocation4 + $0x20] sm:$0xff]
      %v1846 = vld [vmem:[#allocation4 + $0x28] sm:$0xff]
      %1847 = vrot.lane.b32.xlu0 %v604, 65
      %v1848 = vpop.permute.xlu0 %1847
      %1849 = vrot.lane.b32.xlu0 %v608, 65
      %v1850 = vpop.permute.xlu0 %1849
      %1851 = vrot.lane.b32.xlu0 %v612, 65
      %v1852 = vpop.permute.xlu0 %1851
      %1853 = vrot.lane.b32.xlu0 %v616, 65
      %v1854 = vpop.permute.xlu0 %1853
      %v1855 = vsel %vm544, %v1848, %v1850
      %v1856 = vsel %vm544, %v1850, %v1852
      %v1857 = vsel %vm544, %v1852, %v1854
      %v1858 = vsel %vm544, %v1854, %v628
      %v1865 = vmul.f32 %v1841, %v1848
      %v1866 = vmul.f32 %v1842, %v1855
      %v1867 = vmul.f32 %v1843, %v1856
      %v1868 = vmul.f32 %v1844, %v1857
      %v1869 = vmul.f32 %v1845, %v1858
      %v1870 = vmul.f32 %v1846, %v628
      %1877 = vrot.lane.b32.xlu0 %v1865, 63
      %v1878 = vpop.permute.xlu0 %1877
      %1879 = vrot.lane.b32.xlu0 %v1866, 63
      %v1880 = vpop.permute.xlu0 %1879
      %1881 = vrot.lane.b32.xlu0 %v1867, 63
      %v1882 = vpop.permute.xlu0 %1881
      %1883 = vrot.lane.b32.xlu0 %v1868, 63
      %v1884 = vpop.permute.xlu0 %1883
      %1885 = vrot.lane.b32.xlu0 %v1869, 63
      %v1886 = vpop.permute.xlu0 %1885
      %1887 = vrot.lane.b32.xlu0 %v1870, 63
      %v1888 = vpop.permute.xlu0 %1887
      %v1889 = vsel %vm514, %v1878, %v1880
      %v1890 = vsel %vm514, %v1880, %v1882
      %v1891 = vsel %vm514, %v1882, %v1884
      %v1892 = vsel %vm514, %v1884, %v1886
      %v1893 = vsel %vm514, %v1886, %v1888
      %1899 = vst [vmem:[#allocation5 + $0xc8] sm:$0xff] %v1889
      %1900 = vst [vmem:[#allocation5 + $0xd0] sm:$0xff] %v1890
      %1901 = vst [vmem:[#allocation5 + $0xd8] sm:$0xff] %v1891
      %1902 = vst [vmem:[#allocation5 + $0xe0] sm:$0xff] %v1892
      %1903 = vst [vmem:[#allocation5 + $0xe8] sm:$0xff] %v1893
      %v1904 = vld [vmem:[#allocation4] sm:$0xff]
      %v1905 = vld [vmem:[#allocation4 + $0x8] sm:$0xff]
      %v1906 = vld [vmem:[#allocation4 + $0x10] sm:$0xff]
      %v1907 = vld [vmem:[#allocation4 + $0x18] sm:$0xff]
      %v1908 = vld [vmem:[#allocation4 + $0x20] sm:$0xff]
      %v1909 = vld [vmem:[#allocation4 + $0x28] sm:$0xff]
      %1910 = vrot.lane.b32.xlu0 %v683, 71
      %v1911 = vpop.permute.xlu0 %1910
      %1912 = vrot.lane.b32.xlu0 %v687, 71
      %v1913 = vpop.permute.xlu0 %1912
      %1914 = vrot.lane.b32.xlu0 %v691, 71
      %v1915 = vpop.permute.xlu0 %1914
      %1916 = vrot.lane.b32.xlu0 %v695, 71
      %v1917 = vpop.permute.xlu0 %1916
      %v1918 = vsel %vm463, %v1911, %v1913
      %v1919 = vsel %vm463, %v1913, %v1915
      %v1920 = vsel %vm463, %v1915, %v1917
      %v1921 = vsel %vm463, %v1917, %v707
      %v1928 = vmul.f32 %v1904, %v1911
      %v1929 = vmul.f32 %v1905, %v1918
      %v1930 = vmul.f32 %v1906, %v1919
      %v1931 = vmul.f32 %v1907, %v1920
      %v1932 = vmul.f32 %v1908, %v1921
      %v1933 = vmul.f32 %v1909, %v707
      %1940 = vrot.lane.b32.xlu0 %v1928, 57
      %v1941 = vpop.permute.xlu0 %1940
      %1942 = vrot.lane.b32.xlu0 %v1929, 57
      %v1943 = vpop.permute.xlu0 %1942
      %1944 = vrot.lane.b32.xlu0 %v1930, 57
      %v1945 = vpop.permute.xlu0 %1944
      %1946 = vrot.lane.b32.xlu0 %v1931, 57
      %v1947 = vpop.permute.xlu0 %1946
      %1948 = vrot.lane.b32.xlu0 %v1932, 57
      %v1949 = vpop.permute.xlu0 %1948
      %1950 = vrot.lane.b32.xlu0 %v1933, 57
      %v1951 = vpop.permute.xlu0 %1950
      %v1952 = vsel %vm433, %v1941, %v1943
      %v1953 = vsel %vm433, %v1943, %v1945
      %v1954 = vsel %vm433, %v1945, %v1947
      %v1955 = vsel %vm433, %v1947, %v1949
      %v1956 = vsel %vm433, %v1949, %v1951
      %1962 = vst [vmem:[#allocation5 + $0xf0] sm:$0xff] %v1952
      %1963 = vst [vmem:[#allocation5 + $0xf8] sm:$0xff] %v1953
      %1964 = vst [vmem:[#allocation5 + $0x100] sm:$0xff] %v1954
      %1965 = vst [vmem:[#allocation5 + $0x108] sm:$0xff] %v1955
      %1966 = vst [vmem:[#allocation5 + $0x110] sm:$0xff] %v1956
      %v1967 = vld [vmem:[#allocation4] sm:$0xff]
      %v1968 = vld [vmem:[#allocation4 + $0x8] sm:$0xff]
      %v1969 = vld [vmem:[#allocation4 + $0x10] sm:$0xff]
      %v1970 = vld [vmem:[#allocation4 + $0x18] sm:$0xff]
      %v1971 = vld [vmem:[#allocation4 + $0x20] sm:$0xff]
      %v1972 = vld [vmem:[#allocation4 + $0x28] sm:$0xff]
      %1973 = vrot.lane.b32.xlu0 %v762, 72
      %v1974 = vpop.permute.xlu0 %1973
      %1975 = vrot.lane.b32.xlu0 %v766, 72
      %v1976 = vpop.permute.xlu0 %1975
      %1977 = vrot.lane.b32.xlu0 %v770, 72
      %v1978 = vpop.permute.xlu0 %1977
      %1979 = vrot.lane.b32.xlu0 %v774, 72
      %v1980 = vpop.permute.xlu0 %1979
      %v1981 = vsel %vm382, %v1974, %v1976
      %v1982 = vsel %vm382, %v1976, %v1978
      %v1983 = vsel %vm382, %v1978, %v1980
      %v1984 = vsel %vm382, %v1980, %v786
      %v1991 = vmul.f32 %v1967, %v1974
      %v1992 = vmul.f32 %v1968, %v1981
      %v1993 = vmul.f32 %v1969, %v1982
      %v1994 = vmul.f32 %v1970, %v1983
      %v1995 = vmul.f32 %v1971, %v1984
      %v1996 = vmul.f32 %v1972, %v786
      %2003 = vrot.lane.b32.xlu0 %v1991, 56
      %v2004 = vpop.permute.xlu0 %2003
      %2005 = vrot.lane.b32.xlu0 %v1992, 56
      %v2006 = vpop.permute.xlu0 %2005
      %2007 = vrot.lane.b32.xlu0 %v1993, 56
      %v2008 = vpop.permute.xlu0 %2007
      %2009 = vrot.lane.b32.xlu0 %v1994, 56
      %v2010 = vpop.permute.xlu0 %2009
      %2011 = vrot.lane.b32.xlu0 %v1995, 56
      %v2012 = vpop.permute.xlu0 %2011
      %2013 = vrot.lane.b32.xlu0 %v1996, 56
      %v2014 = vpop.permute.xlu0 %2013
      %v2015 = vsel %vm352, %v2004, %v2006
      %v2016 = vsel %vm352, %v2006, %v2008
      %v2017 = vsel %vm352, %v2008, %v2010
      %v2018 = vsel %vm352, %v2010, %v2012
      %v2019 = vsel %vm352, %v2012, %v2014
      %2025 = vst [vmem:[#allocation5 + $0x118] sm:$0xff] %v2015
      %2026 = vst [vmem:[#allocation5 + $0x120] sm:$0xff] %v2016
      %2027 = vst [vmem:[#allocation5 + $0x128] sm:$0xff] %v2017
      %2028 = vst [vmem:[#allocation5 + $0x130] sm:$0xff] %v2018
      %2029 = vst [vmem:[#allocation5 + $0x138] sm:$0xff] %v2019
      %v2030 = vld [vmem:[#allocation4] sm:$0xff]
      %v2031 = vld [vmem:[#allocation4 + $0x8] sm:$0xff]
      %v2032 = vld [vmem:[#allocation4 + $0x10] sm:$0xff]
      %v2033 = vld [vmem:[#allocation4 + $0x18] sm:$0xff]
      %v2034 = vld [vmem:[#allocation4 + $0x20] sm:$0xff]
      %v2035 = vld [vmem:[#allocation4 + $0x28] sm:$0xff]
      %2036 = vrot.lane.b32.xlu0 %v841, 73
      %v2037 = vpop.permute.xlu0 %2036
      %2038 = vrot.lane.b32.xlu0 %v845, 73
      %v2039 = vpop.permute.xlu0 %2038
      %2040 = vrot.lane.b32.xlu0 %v849, 73
      %v2041 = vpop.permute.xlu0 %2040
      %2042 = vrot.lane.b32.xlu0 %v853, 73
      %v2043 = vpop.permute.xlu0 %2042
      %v2044 = vsel %vm301, %v2037, %v2039
      %v2045 = vsel %vm301, %v2039, %v2041
      %v2046 = vsel %vm301, %v2041, %v2043
      %v2047 = vsel %vm301, %v2043, %v865
      %v2054 = vmul.f32 %v2030, %v2037
      %v2055 = vmul.f32 %v2031, %v2044
      %v2056 = vmul.f32 %v2032, %v2045
      %v2057 = vmul.f32 %v2033, %v2046
      %v2058 = vmul.f32 %v2034, %v2047
      %v2059 = vmul.f32 %v2035, %v865
      %2066 = vrot.lane.b32.xlu0 %v2054, 55
      %v2067 = vpop.permute.xlu0 %2066
      %2068 = vrot.lane.b32.xlu0 %v2055, 55
      %v2069 = vpop.permute.xlu0 %2068
      %2070 = vrot.lane.b32.xlu0 %v2056, 55
      %v2071 = vpop.permute.xlu0 %2070
      %2072 = vrot.lane.b32.xlu0 %v2057, 55
      %v2073 = vpop.permute.xlu0 %2072
      %2074 = vrot.lane.b32.xlu0 %v2058, 55
      %v2075 = vpop.permute.xlu0 %2074
      %2076 = vrot.lane.b32.xlu0 %v2059, 55
      %v2077 = vpop.permute.xlu0 %2076
      %v2078 = vsel %vm270, %v2067, %v2069
      %v2079 = vsel %vm270, %v2069, %v2071
      %v2080 = vsel %vm270, %v2071, %v2073
      %v2081 = vsel %vm270, %v2073, %v2075
      %v2082 = vsel %vm270, %v2075, %v2077
      %2088 = vst [vmem:[#allocation5 + $0x140] sm:$0xff] %v2078
      %2089 = vst [vmem:[#allocation5 + $0x148] sm:$0xff] %v2079
      %2090 = vst [vmem:[#allocation5 + $0x150] sm:$0xff] %v2080
      %2091 = vst [vmem:[#allocation5 + $0x158] sm:$0xff] %v2081
      %2092 = vst [vmem:[#allocation5 + $0x160] sm:$0xff] %v2082
      %v2093 = vld [vmem:[%s2] sm:$0xff]
      %v2094 = vld [vmem:[#allocation5] sm:$0xff]
      %v2095 = vld [vmem:[#allocation5 + $0x8] sm:$0xff]
      %v2096 = vld [vmem:[#allocation5 + $0x10] sm:$0xff]
      %v2097 = vld [vmem:[#allocation5 + $0x18] sm:$0xff]
      %v2098 = vld [vmem:[#allocation5 + $0x28] sm:$0xff]
      %v2099 = vld [vmem:[#allocation5 + $0x30] sm:$0xff]
      %v2100 = vld [vmem:[#allocation5 + $0x38] sm:$0xff]
      %v2101 = vld [vmem:[#allocation5 + $0x40] sm:$0xff]
      %v2102 = vld [vmem:[#allocation5 + $0x50] sm:$0xff]
      %v2103 = vld [vmem:[#allocation5 + $0x58] sm:$0xff]
      %v2104 = vld [vmem:[#allocation5 + $0x60] sm:$0xff]
      %v2105 = vld [vmem:[#allocation5 + $0x68] sm:$0xff]
      %v2106 = vld [vmem:[#allocation5 + $0x78] sm:$0xff]
      %v2107 = vld [vmem:[#allocation5 + $0x80] sm:$0xff]
      %v2108 = vld [vmem:[#allocation5 + $0x88] sm:$0xff]
      %v2109 = vld [vmem:[#allocation5 + $0x90] sm:$0xff]
      %v2110 = vld [vmem:[#allocation5 + $0xa0] sm:$0xff]
      %v2111 = vld [vmem:[#allocation5 + $0xa8] sm:$0xff]
      %v2112 = vld [vmem:[#allocation5 + $0xb0] sm:$0xff]
      %v2113 = vld [vmem:[#allocation5 + $0xb8] sm:$0xff]
      %v2114 = vld [vmem:[#allocation5 + $0xc8] sm:$0xff]
      %v2115 = vld [vmem:[#allocation5 + $0xd0] sm:$0xff]
      %v2116 = vld [vmem:[#allocation5 + $0xd8] sm:$0xff]
      %v2117 = vld [vmem:[#allocation5 + $0xe0] sm:$0xff]
      %v2118 = vld [vmem:[#allocation5 + $0xf0] sm:$0xff]
      %v2119 = vld [vmem:[#allocation5 + $0xf8] sm:$0xff]
      %v2120 = vld [vmem:[#allocation5 + $0x100] sm:$0xff]
      %v2121 = vld [vmem:[#allocation5 + $0x108] sm:$0xff]
      %v2122 = vld [vmem:[#allocation5 + $0x118] sm:$0xff]
      %v2123 = vld [vmem:[#allocation5 + $0x120] sm:$0xff]
      %v2124 = vld [vmem:[#allocation5 + $0x128] sm:$0xff]
      %v2125 = vld [vmem:[#allocation5 + $0x130] sm:$0xff]
      %v2126 = vld [vmem:[#allocation5 + $0x140] sm:$0xff]
      %v2127 = vld [vmem:[#allocation5 + $0x148] sm:$0xff]
      %v2128 = vld [vmem:[#allocation5 + $0x150] sm:$0xff]
      %v2129 = vld [vmem:[#allocation5 + $0x158] sm:$0xff]
      %s2130 = scalar_lea.vmem %s2, 8
      %v2131 = vld [vmem:[%s2130] sm:$0xff]
      %v2132 = vld [vmem:[#allocation5] sm:$0xff]
      %v2133 = vld [vmem:[#allocation5 + $0x8] sm:$0xff]
      %v2134 = vld [vmem:[#allocation5 + $0x10] sm:$0xff]
      %v2135 = vld [vmem:[#allocation5 + $0x18] sm:$0xff]
      %v2136 = vld [vmem:[#allocation5 + $0x20] sm:$0xff]
      %v2137 = vld [vmem:[#allocation5 + $0x28] sm:$0xff]
      %v2138 = vld [vmem:[#allocation5 + $0x30] sm:$0xff]
      %v2139 = vld [vmem:[#allocation5 + $0x38] sm:$0xff]
      %v2140 = vld [vmem:[#allocation5 + $0x40] sm:$0xff]
      %v2141 = vld [vmem:[#allocation5 + $0x48] sm:$0xff]
      %v2142 = vld [vmem:[#allocation5 + $0x50] sm:$0xff]
      %v2143 = vld [vmem:[#allocation5 + $0x58] sm:$0xff]
      %v2144 = vld [vmem:[#allocation5 + $0x60] sm:$0xff]
      %v2145 = vld [vmem:[#allocation5 + $0x68] sm:$0xff]
      %v2146 = vld [vmem:[#allocation5 + $0x70] sm:$0xff]
      %v2147 = vld [vmem:[#allocation5 + $0x78] sm:$0xff]
      %v2148 = vld [vmem:[#allocation5 + $0x80] sm:$0xff]
      %v2149 = vld [vmem:[#allocation5 + $0x88] sm:$0xff]
      %v2150 = vld [vmem:[#allocation5 + $0x90] sm:$0xff]
      %v2151 = vld [vmem:[#allocation5 + $0x98] sm:$0xff]
      %v2152 = vld [vmem:[#allocation5 + $0xa0] sm:$0xff]
      %v2153 = vld [vmem:[#allocation5 + $0xa8] sm:$0xff]
      %v2154 = vld [vmem:[#allocation5 + $0xb0] sm:$0xff]
      %v2155 = vld [vmem:[#allocation5 + $0xb8] sm:$0xff]
      %v2156 = vld [vmem:[#allocation5 + $0xc0] sm:$0xff]
      %v2157 = vld [vmem:[#allocation5 + $0xc8] sm:$0xff]
      %v2158 = vld [vmem:[#allocation5 + $0xd0] sm:$0xff]
      %v2159 = vld [vmem:[#allocation5 + $0xd8] sm:$0xff]
      %v2160 = vld [vmem:[#allocation5 + $0xe0] sm:$0xff]
      %v2161 = vld [vmem:[#allocation5 + $0xe8] sm:$0xff]
      %v2162 = vld [vmem:[#allocation5 + $0xf0] sm:$0xff]
      %v2163 = vld [vmem:[#allocation5 + $0xf8] sm:$0xff]
      %v2164 = vld [vmem:[#allocation5 + $0x100] sm:$0xff]
      %v2165 = vld [vmem:[#allocation5 + $0x108] sm:$0xff]
      %v2166 = vld [vmem:[#allocation5 + $0x110] sm:$0xff]
      %v2167 = vld [vmem:[#allocation5 + $0x118] sm:$0xff]
      %v2168 = vld [vmem:[#allocation5 + $0x120] sm:$0xff]
      %v2169 = vld [vmem:[#allocation5 + $0x128] sm:$0xff]
      %v2170 = vld [vmem:[#allocation5 + $0x130] sm:$0xff]
      %v2171 = vld [vmem:[#allocation5 + $0x138] sm:$0xff]
      %v2172 = vld [vmem:[#allocation5 + $0x140] sm:$0xff]
      %v2173 = vld [vmem:[#allocation5 + $0x148] sm:$0xff]
      %v2174 = vld [vmem:[#allocation5 + $0x150] sm:$0xff]
      %v2175 = vld [vmem:[#allocation5 + $0x158] sm:$0xff]
      %v2176 = vld [vmem:[#allocation5 + $0x160] sm:$0xff]
      %2222 = vrot.lane.b32.xlu0 %v2132, 64
      %v2223 = vpop.permute.xlu0 %2222
      %2224 = vrot.lane.b32.xlu0 %v2133, 64
      %v2225 = vpop.permute.xlu0 %2224
      %2226 = vrot.lane.b32.xlu0 %v2134, 64
      %v2227 = vpop.permute.xlu0 %2226
      %2228 = vrot.lane.b32.xlu0 %v2135, 64
      %v2229 = vpop.permute.xlu0 %2228
      %2230 = vrot.lane.b32.xlu0 %v2136, 64
      %v2231 = vpop.permute.xlu0 %2230
      %2232 = vrot.lane.b32.xlu0 %v2137, 64
      %v2233 = vpop.permute.xlu0 %2232
      %2234 = vrot.lane.b32.xlu0 %v2138, 64
      %v2235 = vpop.permute.xlu0 %2234
      %2236 = vrot.lane.b32.xlu0 %v2139, 64
      %v2237 = vpop.permute.xlu0 %2236
      %2238 = vrot.lane.b32.xlu0 %v2140, 64
      %v2239 = vpop.permute.xlu0 %2238
      %2240 = vrot.lane.b32.xlu0 %v2141, 64
      %v2241 = vpop.permute.xlu0 %2240
      %2242 = vrot.lane.b32.xlu0 %v2142, 64
      %v2243 = vpop.permute.xlu0 %2242
      %2244 = vrot.lane.b32.xlu0 %v2143, 64
      %v2245 = vpop.permute.xlu0 %2244
      %2246 = vrot.lane.b32.xlu0 %v2144, 64
      %v2247 = vpop.permute.xlu0 %2246
      %2248 = vrot.lane.b32.xlu0 %v2145, 64
      %v2249 = vpop.permute.xlu0 %2248
      %2250 = vrot.lane.b32.xlu0 %v2146, 64
      %v2251 = vpop.permute.xlu0 %2250
      %2252 = vrot.lane.b32.xlu0 %v2147, 64
      %v2253 = vpop.permute.xlu0 %2252
      %2254 = vrot.lane.b32.xlu0 %v2148, 64
      %v2255 = vpop.permute.xlu0 %2254
      %2256 = vrot.lane.b32.xlu0 %v2149, 64
      %v2257 = vpop.permute.xlu0 %2256
      %2258 = vrot.lane.b32.xlu0 %v2150, 64
      %v2259 = vpop.permute.xlu0 %2258
      %2260 = vrot.lane.b32.xlu0 %v2151, 64
      %v2261 = vpop.permute.xlu0 %2260
      %2262 = vrot.lane.b32.xlu0 %v2152, 64
      %v2263 = vpop.permute.xlu0 %2262
      %2264 = vrot.lane.b32.xlu0 %v2153, 64
      %v2265 = vpop.permute.xlu0 %2264
      %2266 = vrot.lane.b32.xlu0 %v2154, 64
      %v2267 = vpop.permute.xlu0 %2266
      %2268 = vrot.lane.b32.xlu0 %v2155, 64
      %v2269 = vpop.permute.xlu0 %2268
      %2270 = vrot.lane.b32.xlu0 %v2156, 64
      %v2271 = vpop.permute.xlu0 %2270
      %2272 = vrot.lane.b32.xlu0 %v2157, 64
      %v2273 = vpop.permute.xlu0 %2272
      %2274 = vrot.lane.b32.xlu0 %v2158, 64
      %v2275 = vpop.permute.xlu0 %2274
      %2276 = vrot.lane.b32.xlu0 %v2159, 64
      %v2277 = vpop.permute.xlu0 %2276
      %2278 = vrot.lane.b32.xlu0 %v2160, 64
      %v2279 = vpop.permute.xlu0 %2278
      %2280 = vrot.lane.b32.xlu0 %v2161, 64
      %v2281 = vpop.permute.xlu0 %2280
      %2282 = vrot.lane.b32.xlu0 %v2162, 64
      %v2283 = vpop.permute.xlu0 %2282
      %2284 = vrot.lane.b32.xlu0 %v2163, 64
      %v2285 = vpop.permute.xlu0 %2284
      %2286 = vrot.lane.b32.xlu0 %v2164, 64
      %v2287 = vpop.permute.xlu0 %2286
      %2288 = vrot.lane.b32.xlu0 %v2165, 64
      %v2289 = vpop.permute.xlu0 %2288
      %2290 = vrot.lane.b32.xlu0 %v2166, 64
      %v2291 = vpop.permute.xlu0 %2290
      %2292 = vrot.lane.b32.xlu0 %v2167, 64
      %v2293 = vpop.permute.xlu0 %2292
      %2294 = vrot.lane.b32.xlu0 %v2168, 64
      %v2295 = vpop.permute.xlu0 %2294
      %2296 = vrot.lane.b32.xlu0 %v2169, 64
      %v2297 = vpop.permute.xlu0 %2296
      %2298 = vrot.lane.b32.xlu0 %v2170, 64
      %v2299 = vpop.permute.xlu0 %2298
      %2300 = vrot.lane.b32.xlu0 %v2171, 64
      %v2301 = vpop.permute.xlu0 %2300
      %2302 = vrot.lane.b32.xlu0 %v2172, 64
      %v2303 = vpop.permute.xlu0 %2302
      %2304 = vrot.lane.b32.xlu0 %v2173, 64
      %v2305 = vpop.permute.xlu0 %2304
      %2306 = vrot.lane.b32.xlu0 %v2174, 64
      %v2307 = vpop.permute.xlu0 %2306
      %2308 = vrot.lane.b32.xlu0 %v2175, 64
      %v2309 = vpop.permute.xlu0 %2308
      %2310 = vrot.lane.b32.xlu0 %v2176, 64
      %v2311 = vpop.permute.xlu0 %2310
      %v2312 = vsel %vm581, %v2223, %v2225
      %v2313 = vsel %vm581, %v2225, %v2227
      %v2314 = vsel %vm581, %v2227, %v2229
      %v2315 = vsel %vm581, %v2229, %v2231
      %v2316 = vsel %vm581, %v2233, %v2235
      %v2317 = vsel %vm581, %v2235, %v2237
      %v2318 = vsel %vm581, %v2237, %v2239
      %v2319 = vsel %vm581, %v2239, %v2241
      %v2320 = vsel %vm581, %v2243, %v2245
      %v2321 = vsel %vm581, %v2245, %v2247
      %v2322 = vsel %vm581, %v2247, %v2249
      %v2323 = vsel %vm581, %v2249, %v2251
      %v2324 = vsel %vm581, %v2253, %v2255
      %v2325 = vsel %vm581, %v2255, %v2257
      %v2326 = vsel %vm581, %v2257, %v2259
      %v2327 = vsel %vm581, %v2259, %v2261
      %v2328 = vsel %vm581, %v2263, %v2265
      %v2329 = vsel %vm581, %v2265, %v2267
      %v2330 = vsel %vm581, %v2267, %v2269
      %v2331 = vsel %vm581, %v2269, %v2271
      %v2332 = vsel %vm581, %v2273, %v2275
      %v2333 = vsel %vm581, %v2275, %v2277
      %v2334 = vsel %vm581, %v2277, %v2279
      %v2335 = vsel %vm581, %v2279, %v2281
      %v2336 = vsel %vm581, %v2283, %v2285
      %v2337 = vsel %vm581, %v2285, %v2287
      %v2338 = vsel %vm581, %v2287, %v2289
      %v2339 = vsel %vm581, %v2289, %v2291
      %v2340 = vsel %vm581, %v2293, %v2295
      %v2341 = vsel %vm581, %v2295, %v2297
      %v2342 = vsel %vm581, %v2297, %v2299
      %v2343 = vsel %vm581, %v2299, %v2301
      %v2344 = vsel %vm581, %v2303, %v2305
      %v2345 = vsel %vm581, %v2305, %v2307
      %v2346 = vsel %vm581, %v2307, %v2309
      %v2347 = vsel %vm581, %v2309, %v2311
      %v2385 = vsel %vm382, %v2131, 0
      %2387 = vmatprep.subr.mxu0 0.0
      %2388 = vmatpush1.msra.mxu0 0.0
      %2389 = vmatprep.subr.mxu0 0.0
      %2390 = vmatpush1.msra.mxu0 0.0
      %2391 = vmatprep.subr.mxu0 0.0
      %2392 = vmatpush1.msra.mxu0 0.0
      %2393 = vmatprep.subr.mxu0 0.0
      %2394 = vmatpush1.msra.mxu0 0.0
      %2395 = vmatprep.subr.mxu0 0.0
      %2396 = vmatpush1.msra.mxu0 0.0
      %2397 = vmatprep.subr.mxu0 0.0
      %2398 = vmatpush1.msra.mxu0 0.0
      %2399 = vmatprep.subr.mxu0 0.0
      %2400 = vmatpush1.msra.mxu0 0.0
      %2401 = vmatprep.subr.mxu0 %v2345
      %2402 = vmatpush1.msra.mxu0 %v2344
      %2403 = vmatprep.subr.mxu0 %v2341
      %2404 = vmatpush1.msra.mxu0 %v2340
      %2405 = vmatprep.subr.mxu0 %v2337
      %2406 = vmatpush1.msra.mxu0 %v2336
      %2407 = vmatprep.subr.mxu0 %v2333
      %2408 = vmatpush1.msra.mxu0 %v2332
      %2409 = vmatprep.subr.mxu0 %v2329
      %2410 = vmatpush1.msra.mxu0 %v2328
      %2411 = vmatprep.subr.mxu0 %v2325
      %2412 = vmatpush1.msra.mxu0 %v2324
      %2413 = vmatprep.subr.mxu0 %v2321
      %2414 = vmatpush1.msra.mxu0 %v2320
      %2415 = vmatprep.subr.mxu0 %v2317
      %2416 = vmatpush1.msra.mxu0 %v2316
      %2417 = vmatprep.subr.mxu0 %v2313
      %2418 = vmatpush1.msra.mxu0 %v2312
      %2419 = vmatprep.subr.mxu0 0.0
      %2420 = vmatpush2.msra.mxu0 0.0
      %2421 = vmatprep.subr.mxu0 0.0
      %2422 = vmatpush2.msra.mxu0 0.0
      %2423 = vmatprep.subr.mxu0 0.0
      %2424 = vmatpush2.msra.mxu0 0.0
      %2425 = vmatprep.subr.mxu0 0.0
      %2426 = vmatpush2.msra.mxu0 0.0
      %2427 = vmatprep.subr.mxu0 0.0
      %2428 = vmatpush2.msra.mxu0 0.0
      %2429 = vmatprep.subr.mxu0 0.0
      %2430 = vmatpush2.msra.mxu0 0.0
      %2431 = vmatprep.subr.mxu0 0.0
      %2432 = vmatpush2.msra.mxu0 0.0
      %2433 = vmatprep.subr.mxu0 0.0
      %2434 = vmatpush2.msra.mxu0 0.0
      %2435 = vmatprep.subr.mxu0 0.0
      %2436 = vmatpush2.msra.mxu0 0.0
      %2437 = vmatprep.subr.mxu0 0.0
      %2438 = vmatpush2.msra.mxu0 0.0
      %2439 = vmatprep.subr.mxu0 0.0
      %2440 = vmatpush2.msra.mxu0 0.0
      %2441 = vmatprep.subr.mxu0 0.0
      %2442 = vmatpush2.msra.mxu0 0.0
      %2443 = vmatprep.subr.mxu0 0.0
      %2444 = vmatpush2.msra.mxu0 0.0
      %2445 = vmatprep.subr.mxu0 0.0
      %2446 = vmatpush2.msra.mxu0 0.0
      %2447 = vmatprep.subr.mxu0 0.0
      %2448 = vmatpush2.msra.mxu0 0.0
      %2449 = vmatprep.subr.mxu0 0.0
      %2450 = vmatpush2.msra.mxu0 0.0
      %2451 = vmatprep.mubr.f32.mxu0 0.0
      %2452 = vmatmul.mubr.f32.gmra.mxu0 %v2385
      %v2453 = vpop.f32.mrf.mxu0
      %v2454 = vadd.f32 0.0, %v2453
      %v2455 = vpop.f32.mrf.mxu0
      %v2456 = vadd.f32 0.0, %v2455
      %2457 = vdwg.mxu0
      %2458 = vmatprep.subr.mxu0 0.0
      %2459 = vmatpush1.msra.mxu0 0.0
      %2460 = vmatprep.subr.mxu0 0.0
      %2461 = vmatpush1.msra.mxu0 0.0
      %2462 = vmatprep.subr.mxu0 0.0
      %2463 = vmatpush1.msra.mxu0 0.0
      %2464 = vmatprep.subr.mxu0 0.0
      %2465 = vmatpush1.msra.mxu0 0.0
      %2466 = vmatprep.subr.mxu0 0.0
      %2467 = vmatpush1.msra.mxu0 0.0
      %2468 = vmatprep.subr.mxu0 0.0
      %2469 = vmatpush1.msra.mxu0 0.0
      %2470 = vmatprep.subr.mxu0 0.0
      %2471 = vmatpush1.msra.mxu0 0.0
      %2472 = vmatprep.subr.mxu0 %v2347
      %2473 = vmatpush1.msra.mxu0 %v2346
      %2474 = vmatprep.subr.mxu0 %v2343
      %2475 = vmatpush1.msra.mxu0 %v2342
      %2476 = vmatprep.subr.mxu0 %v2339
      %2477 = vmatpush1.msra.mxu0 %v2338
      %2478 = vmatprep.subr.mxu0 %v2335
      %2479 = vmatpush1.msra.mxu0 %v2334
      %2480 = vmatprep.subr.mxu0 %v2331
      %2481 = vmatpush1.msra.mxu0 %v2330
      %2482 = vmatprep.subr.mxu0 %v2327
      %2483 = vmatpush1.msra.mxu0 %v2326
      %2484 = vmatprep.subr.mxu0 %v2323
      %2485 = vmatpush1.msra.mxu0 %v2322
      %2486 = vmatprep.subr.mxu0 %v2319
      %2487 = vmatpush1.msra.mxu0 %v2318
      %2488 = vmatprep.subr.mxu0 %v2315
      %2489 = vmatpush1.msra.mxu0 %v2314
      %2490 = vmatprep.subr.mxu0 0.0
      %2491 = vmatpush2.msra.mxu0 0.0
      %2492 = vmatprep.subr.mxu0 0.0
      %2493 = vmatpush2.msra.mxu0 0.0
      %2494 = vmatprep.subr.mxu0 0.0
      %2495 = vmatpush2.msra.mxu0 0.0
      %2496 = vmatprep.subr.mxu0 0.0
      %2497 = vmatpush2.msra.mxu0 0.0
      %2498 = vmatprep.subr.mxu0 0.0
      %2499 = vmatpush2.msra.mxu0 0.0
      %2500 = vmatprep.subr.mxu0 0.0
      %2501 = vmatpush2.msra.mxu0 0.0
      %2502 = vmatprep.subr.mxu0 0.0
      %2503 = vmatpush2.msra.mxu0 0.0
      %2504 = vmatprep.subr.mxu0 0.0
      %2505 = vmatpush2.msra.mxu0 0.0
      %2506 = vmatprep.subr.mxu0 0.0
      %2507 = vmatpush2.msra.mxu0 0.0
      %2508 = vmatprep.subr.mxu0 0.0
      %2509 = vmatpush2.msra.mxu0 0.0
      %2510 = vmatprep.subr.mxu0 0.0
      %2511 = vmatpush2.msra.mxu0 0.0
      %2512 = vmatprep.subr.mxu0 0.0
      %2513 = vmatpush2.msra.mxu0 0.0
      %2514 = vmatprep.subr.mxu0 0.0
      %2515 = vmatpush2.msra.mxu0 0.0
      %2516 = vmatprep.subr.mxu0 0.0
      %2517 = vmatpush2.msra.mxu0 0.0
      %2518 = vmatprep.subr.mxu0 0.0
      %2519 = vmatpush2.msra.mxu0 0.0
      %2520 = vmatprep.subr.mxu0 0.0
      %2521 = vmatpush2.msra.mxu0 0.0
      %2522 = vmatprep.mubr.f32.mxu0 0.0
      %2523 = vmatmul.mubr.f32.gmra.mxu0 %v2385
      %v2524 = vpop.f32.mrf.mxu0
      %v2525 = vadd.f32 0.0, %v2524
      %v2526 = vpop.f32.mrf.mxu0
      %v2527 = vadd.f32 0.0, %v2526
      %2528 = vdwg.mxu0
      %v2530 = vsel %vm382, %v2093, 0
      %2532 = vmatprep.subr.mxu0 0.0
      %2533 = vmatpush1.msra.mxu0 0.0
      %2534 = vmatprep.subr.mxu0 0.0
      %2535 = vmatpush1.msra.mxu0 0.0
      %2536 = vmatprep.subr.mxu0 0.0
      %2537 = vmatpush1.msra.mxu0 0.0
      %2538 = vmatprep.subr.mxu0 0.0
      %2539 = vmatpush1.msra.mxu0 0.0
      %2540 = vmatprep.subr.mxu0 0.0
      %2541 = vmatpush1.msra.mxu0 0.0
      %2542 = vmatprep.subr.mxu0 0.0
      %2543 = vmatpush1.msra.mxu0 0.0
      %2544 = vmatprep.subr.mxu0 0.0
      %2545 = vmatpush1.msra.mxu0 0.0
      %2546 = vmatprep.subr.mxu0 %v2127
      %2547 = vmatpush1.msra.mxu0 %v2126
      %2548 = vmatprep.subr.mxu0 %v2123
      %2549 = vmatpush1.msra.mxu0 %v2122
      %2550 = vmatprep.subr.mxu0 %v2119
      %2551 = vmatpush1.msra.mxu0 %v2118
      %2552 = vmatprep.subr.mxu0 %v2115
      %2553 = vmatpush1.msra.mxu0 %v2114
      %2554 = vmatprep.subr.mxu0 %v2111
      %2555 = vmatpush1.msra.mxu0 %v2110
      %2556 = vmatprep.subr.mxu0 %v2107
      %2557 = vmatpush1.msra.mxu0 %v2106
      %2558 = vmatprep.subr.mxu0 %v2103
      %2559 = vmatpush1.msra.mxu0 %v2102
      %2560 = vmatprep.subr.mxu0 %v2099
      %2561 = vmatpush1.msra.mxu0 %v2098
      %2562 = vmatprep.subr.mxu0 %v2095
      %2563 = vmatpush1.msra.mxu0 %v2094
      %2564 = vmatprep.subr.mxu0 0.0
      %2565 = vmatpush2.msra.mxu0 0.0
      %2566 = vmatprep.subr.mxu0 0.0
      %2567 = vmatpush2.msra.mxu0 0.0
      %2568 = vmatprep.subr.mxu0 0.0
      %2569 = vmatpush2.msra.mxu0 0.0
      %2570 = vmatprep.subr.mxu0 0.0
      %2571 = vmatpush2.msra.mxu0 0.0
      %2572 = vmatprep.subr.mxu0 0.0
      %2573 = vmatpush2.msra.mxu0 0.0
      %2574 = vmatprep.subr.mxu0 0.0
      %2575 = vmatpush2.msra.mxu0 0.0
      %2576 = vmatprep.subr.mxu0 0.0
      %2577 = vmatpush2.msra.mxu0 0.0
      %2578 = vmatprep.subr.mxu0 0.0
      %2579 = vmatpush2.msra.mxu0 0.0
      %2580 = vmatprep.subr.mxu0 0.0
      %2581 = vmatpush2.msra.mxu0 0.0
      %2582 = vmatprep.subr.mxu0 0.0
      %2583 = vmatpush2.msra.mxu0 0.0
      %2584 = vmatprep.subr.mxu0 0.0
      %2585 = vmatpush2.msra.mxu0 0.0
      %2586 = vmatprep.subr.mxu0 0.0
      %2587 = vmatpush2.msra.mxu0 0.0
      %2588 = vmatprep.subr.mxu0 0.0
      %2589 = vmatpush2.msra.mxu0 0.0
      %2590 = vmatprep.subr.mxu0 0.0
      %2591 = vmatpush2.msra.mxu0 0.0
      %2592 = vmatprep.subr.mxu0 0.0
      %2593 = vmatpush2.msra.mxu0 0.0
      %2594 = vmatprep.subr.mxu0 0.0
      %2595 = vmatpush2.msra.mxu0 0.0
      %2596 = vmatprep.mubr.f32.mxu0 0.0
      %2597 = vmatmul.mubr.f32.gmra.mxu0 %v2530
      %v2598 = vpop.f32.mrf.mxu0
      %v2599 = vadd.f32 %v2454, %v2598
      %v2600 = vpop.f32.mrf.mxu0
      %v2601 = vadd.f32 %v2456, %v2600
      %2602 = vdwg.mxu0
      %2603 = vmatprep.subr.mxu0 0.0
      %2604 = vmatpush1.msra.mxu0 0.0
      %2605 = vmatprep.subr.mxu0 0.0
      %2606 = vmatpush1.msra.mxu0 0.0
      %2607 = vmatprep.subr.mxu0 0.0
      %2608 = vmatpush1.msra.mxu0 0.0
      %2609 = vmatprep.subr.mxu0 0.0
      %2610 = vmatpush1.msra.mxu0 0.0
      %2611 = vmatprep.subr.mxu0 0.0
      %2612 = vmatpush1.msra.mxu0 0.0
      %2613 = vmatprep.subr.mxu0 0.0
      %2614 = vmatpush1.msra.mxu0 0.0
      %2615 = vmatprep.subr.mxu0 0.0
      %2616 = vmatpush1.msra.mxu0 0.0
      %2617 = vmatprep.subr.mxu0 %v2129
      %2618 = vmatpush1.msra.mxu0 %v2128
      %2619 = vmatprep.subr.mxu0 %v2125
      %2620 = vmatpush1.msra.mxu0 %v2124
      %2621 = vmatprep.subr.mxu0 %v2121
      %2622 = vmatpush1.msra.mxu0 %v2120
      %2623 = vmatprep.subr.mxu0 %v2117
      %2624 = vmatpush1.msra.mxu0 %v2116
      %2625 = vmatprep.subr.mxu0 %v2113
      %2626 = vmatpush1.msra.mxu0 %v2112
      %2627 = vmatprep.subr.mxu0 %v2109
      %2628 = vmatpush1.msra.mxu0 %v2108
      %2629 = vmatprep.subr.mxu0 %v2105
      %2630 = vmatpush1.msra.mxu0 %v2104
      %2631 = vmatprep.subr.mxu0 %v2101
      %2632 = vmatpush1.msra.mxu0 %v2100
      %2633 = vmatprep.subr.mxu0 %v2097
      %2634 = vmatpush1.msra.mxu0 %v2096
      %2635 = vmatprep.subr.mxu0 0.0
      %2636 = vmatpush2.msra.mxu0 0.0
      %2637 = vmatprep.subr.mxu0 0.0
      %2638 = vmatpush2.msra.mxu0 0.0
      %2639 = vmatprep.subr.mxu0 0.0
      %2640 = vmatpush2.msra.mxu0 0.0
      %2641 = vmatprep.subr.mxu0 0.0
      %2642 = vmatpush2.msra.mxu0 0.0
      %2643 = vmatprep.subr.mxu0 0.0
      %2644 = vmatpush2.msra.mxu0 0.0
      %2645 = vmatprep.subr.mxu0 0.0
      %2646 = vmatpush2.msra.mxu0 0.0
      %2647 = vmatprep.subr.mxu0 0.0
      %2648 = vmatpush2.msra.mxu0 0.0
      %2649 = vmatprep.subr.mxu0 0.0
      %2650 = vmatpush2.msra.mxu0 0.0
      %2651 = vmatprep.subr.mxu0 0.0
      %2652 = vmatpush2.msra.mxu0 0.0
      %2653 = vmatprep.subr.mxu0 0.0
      %2654 = vmatpush2.msra.mxu0 0.0
      %2655 = vmatprep.subr.mxu0 0.0
      %2656 = vmatpush2.msra.mxu0 0.0
      %2657 = vmatprep.subr.mxu0 0.0
      %2658 = vmatpush2.msra.mxu0 0.0
      %2659 = vmatprep.subr.mxu0 0.0
      %2660 = vmatpush2.msra.mxu0 0.0
      %2661 = vmatprep.subr.mxu0 0.0
      %2662 = vmatpush2.msra.mxu0 0.0
      %2663 = vmatprep.subr.mxu0 0.0
      %2664 = vmatpush2.msra.mxu0 0.0
      %2665 = vmatprep.subr.mxu0 0.0
      %2666 = vmatpush2.msra.mxu0 0.0
      %2667 = vmatprep.mubr.f32.mxu0 0.0
      %2668 = vmatmul.mubr.f32.gmra.mxu0 %v2530
      %v2669 = vpop.f32.mrf.mxu0
      %v2670 = vadd.f32 %v2525, %v2669
      %v2671 = vpop.f32.mrf.mxu0
      %v2672 = vadd.f32 %v2527, %v2671
      %2673 = vdwg.mxu0
      %s2674 = scalar_lea.vmem %s2, 16
      %v2675 = vld [vmem:[%s2674] sm:$0xff]
      %v2677 = vsel %vm382, %v2675, 0
      %2679 = vmatprep.subr.mxu0 0.0
      %2680 = vmatpush1.msra.mxu0 0.0
      %2681 = vmatprep.subr.mxu0 0.0
      %2682 = vmatpush1.msra.mxu0 0.0
      %2683 = vmatprep.subr.mxu0 0.0
      %2684 = vmatpush1.msra.mxu0 0.0
      %2685 = vmatprep.subr.mxu0 0.0
      %2686 = vmatpush1.msra.mxu0 0.0
      %2687 = vmatprep.subr.mxu0 0.0
      %2688 = vmatpush1.msra.mxu0 0.0
      %2689 = vmatprep.subr.mxu0 0.0
      %2690 = vmatpush1.msra.mxu0 0.0
      %2691 = vmatprep.subr.mxu0 0.0
      %2692 = vmatpush1.msra.mxu0 0.0
      %2693 = vmatprep.subr.mxu0 %v2174
      %2694 = vmatpush1.msra.mxu0 %v2173
      %2695 = vmatprep.subr.mxu0 %v2169
      %2696 = vmatpush1.msra.mxu0 %v2168
      %2697 = vmatprep.subr.mxu0 %v2164
      %2698 = vmatpush1.msra.mxu0 %v2163
      %2699 = vmatprep.subr.mxu0 %v2159
      %2700 = vmatpush1.msra.mxu0 %v2158
      %2701 = vmatprep.subr.mxu0 %v2154
      %2702 = vmatpush1.msra.mxu0 %v2153
      %2703 = vmatprep.subr.mxu0 %v2149
      %2704 = vmatpush1.msra.mxu0 %v2148
      %2705 = vmatprep.subr.mxu0 %v2144
      %2706 = vmatpush1.msra.mxu0 %v2143
      %2707 = vmatprep.subr.mxu0 %v2139
      %2708 = vmatpush1.msra.mxu0 %v2138
      %2709 = vmatprep.subr.mxu0 %v2134
      %2710 = vmatpush1.msra.mxu0 %v2133
      %2711 = vmatprep.subr.mxu0 0.0
      %2712 = vmatpush2.msra.mxu0 0.0
      %2713 = vmatprep.subr.mxu0 0.0
      %2714 = vmatpush2.msra.mxu0 0.0
      %2715 = vmatprep.subr.mxu0 0.0
      %2716 = vmatpush2.msra.mxu0 0.0
      %2717 = vmatprep.subr.mxu0 0.0
      %2718 = vmatpush2.msra.mxu0 0.0
      %2719 = vmatprep.subr.mxu0 0.0
      %2720 = vmatpush2.msra.mxu0 0.0
      %2721 = vmatprep.subr.mxu0 0.0
      %2722 = vmatpush2.msra.mxu0 0.0
      %2723 = vmatprep.subr.mxu0 0.0
      %2724 = vmatpush2.msra.mxu0 0.0
      %2725 = vmatprep.subr.mxu0 0.0
      %2726 = vmatpush2.msra.mxu0 0.0
      %2727 = vmatprep.subr.mxu0 0.0
      %2728 = vmatpush2.msra.mxu0 0.0
      %2729 = vmatprep.subr.mxu0 0.0
      %2730 = vmatpush2.msra.mxu0 0.0
      %2731 = vmatprep.subr.mxu0 0.0
      %2732 = vmatpush2.msra.mxu0 0.0
      %2733 = vmatprep.subr.mxu0 0.0
      %2734 = vmatpush2.msra.mxu0 0.0
      %2735 = vmatprep.subr.mxu0 0.0
      %2736 = vmatpush2.msra.mxu0 0.0
      %2737 = vmatprep.subr.mxu0 0.0
      %2738 = vmatpush2.msra.mxu0 0.0
      %2739 = vmatprep.subr.mxu0 0.0
      %2740 = vmatpush2.msra.mxu0 0.0
      %2741 = vmatprep.subr.mxu0 0.0
      %2742 = vmatpush2.msra.mxu0 0.0
      %2743 = vmatprep.mubr.f32.mxu0 0.0
      %2744 = vmatmul.mubr.f32.gmra.mxu0 %v2677
      %v2745 = vpop.f32.mrf.mxu0
      %v2746 = vadd.f32 0.0, %v2745
      %v2747 = vpop.f32.mrf.mxu0
      %v2748 = vadd.f32 0.0, %v2747
      %2749 = vdwg.mxu0
      %2750 = vmatprep.subr.mxu0 0.0
      %2751 = vmatpush1.msra.mxu0 0.0
      %2752 = vmatprep.subr.mxu0 0.0
      %2753 = vmatpush1.msra.mxu0 0.0
      %2754 = vmatprep.subr.mxu0 0.0
      %2755 = vmatpush1.msra.mxu0 0.0
      %2756 = vmatprep.subr.mxu0 0.0
      %2757 = vmatpush1.msra.mxu0 0.0
      %2758 = vmatprep.subr.mxu0 0.0
      %2759 = vmatpush1.msra.mxu0 0.0
      %2760 = vmatprep.subr.mxu0 0.0
      %2761 = vmatpush1.msra.mxu0 0.0
      %2762 = vmatprep.subr.mxu0 0.0
      %2763 = vmatpush1.msra.mxu0 0.0
      %2764 = vmatprep.subr.mxu0 %v2176
      %2765 = vmatpush1.msra.mxu0 %v2175
      %2766 = vmatprep.subr.mxu0 %v2171
      %2767 = vmatpush1.msra.mxu0 %v2170
      %2768 = vmatprep.subr.mxu0 %v2166
      %2769 = vmatpush1.msra.mxu0 %v2165
      %2770 = vmatprep.subr.mxu0 %v2161
      %2771 = vmatpush1.msra.mxu0 %v2160
      %2772 = vmatprep.subr.mxu0 %v2156
      %2773 = vmatpush1.msra.mxu0 %v2155
      %2774 = vmatprep.subr.mxu0 %v2151
      %2775 = vmatpush1.msra.mxu0 %v2150
      %2776 = vmatprep.subr.mxu0 %v2146
      %2777 = vmatpush1.msra.mxu0 %v2145
      %2778 = vmatprep.subr.mxu0 %v2141
      %2779 = vmatpush1.msra.mxu0 %v2140
      %2780 = vmatprep.subr.mxu0 %v2136
      %2781 = vmatpush1.msra.mxu0 %v2135
      %2782 = vmatprep.subr.mxu0 0.0
      %2783 = vmatpush2.msra.mxu0 0.0
      %2784 = vmatprep.subr.mxu0 0.0
      %2785 = vmatpush2.msra.mxu0 0.0
      %2786 = vmatprep.subr.mxu0 0.0
      %2787 = vmatpush2.msra.mxu0 0.0
      %2788 = vmatprep.subr.mxu0 0.0
      %2789 = vmatpush2.msra.mxu0 0.0
      %2790 = vmatprep.subr.mxu0 0.0
      %2791 = vmatpush2.msra.mxu0 0.0
      %2792 = vmatprep.subr.mxu0 0.0
      %2793 = vmatpush2.msra.mxu0 0.0
      %2794 = vmatprep.subr.mxu0 0.0
      %2795 = vmatpush2.msra.mxu0 0.0
      %2796 = vmatprep.subr.mxu0 0.0
      %2797 = vmatpush2.msra.mxu0 0.0
      %2798 = vmatprep.subr.mxu0 0.0
      %2799 = vmatpush2.msra.mxu0 0.0
      %2800 = vmatprep.subr.mxu0 0.0
      %2801 = vmatpush2.msra.mxu0 0.0
      %2802 = vmatprep.subr.mxu0 0.0
      %2803 = vmatpush2.msra.mxu0 0.0
      %2804 = vmatprep.subr.mxu0 0.0
      %2805 = vmatpush2.msra.mxu0 0.0
      %2806 = vmatprep.subr.mxu0 0.0
      %2807 = vmatpush2.msra.mxu0 0.0
      %2808 = vmatprep.subr.mxu0 0.0
      %2809 = vmatpush2.msra.mxu0 0.0
      %2810 = vmatprep.subr.mxu0 0.0
      %2811 = vmatpush2.msra.mxu0 0.0
      %2812 = vmatprep.subr.mxu0 0.0
      %2813 = vmatpush2.msra.mxu0 0.0
      %2814 = vmatprep.mubr.f32.mxu0 0.0
      %2815 = vmatmul.mubr.f32.gmra.mxu0 %v2677
      %v2816 = vpop.f32.mrf.mxu0
      %v2817 = vadd.f32 0.0, %v2816
      %v2818 = vpop.f32.mrf.mxu0
      %v2819 = vadd.f32 0.0, %v2818
      %2820 = vdwg.mxu0
      %v2821 = vadd.f32 %v2599, %v2746
      %v2822 = vadd.f32 %v2601, %v2748
      %v2823 = vadd.f32 %v2670, %v2817
      %v2824 = vadd.f32 %v2672, %v2819
      %v2825 = vadd.f32 %v2821, %v2822
      %v2826 = vadd.f32 %v2825, %v2823
      %v2827 = vadd.f32 %v2826, %v2824
      %2828 = vadd.xlane.f32.xlu0 %v2827
      %v2829 = vpop.xlane.xlu0 %2828
      %v2830 = vmul.f32 %v2821, %v2821
      %v2831 = vmul.f32 %v2822, %v2822
      %v2832 = vmul.f32 %v2823, %v2823
      %v2833 = vmul.f32 %v2824, %v2824
      %v2834 = vadd.f32 %v2830, %v2831
      %v2835 = vadd.f32 %v2834, %v2832
      %v2836 = vadd.f32 %v2835, %v2833
      %2837 = vadd.xlane.f32.xlu0 %v2836
      %v2838 = vpop.xlane.xlu0 %2837
      %v2839 = vmul.f32 %v2829, 0.001953125
      %v2840 = vmul.f32 %v2838, 0.001953125
      %v2841 = vmul.f32 %v2839, %v2839
      %v2842 = vsub.f32 %v2840, %v2841
      %v2843 = vsub.f32 %v2821, %v2839
      %v2844 = vsub.f32 %v2822, %v2839
      %v2845 = vsub.f32 %v2823, %v2839
      %v2846 = vsub.f32 %v2824, %v2839
      %v2847 = vadd.f32 %v2842, 1e-05
      %v2848 = vrsqrt.pop %v2847
      %v2849 = vmul.f32 %v2843, %v2848
      %v2850 = vmul.f32 %v2844, %v2848
      %v2851 = vmul.f32 %v2845, %v2848
      %v2852 = vmul.f32 %v2846, %v2848
      %v2853 = vmax.f32 %v2849, 0.0
      %v2854 = vmax.f32 %v2850, 0.0
      %v2855 = vmax.f32 %v2851, 0.0
      %v2856 = vmax.f32 %v2852, 0.0
      %2857 = vst [vmem:[%s197] sm:$0xff] %v2853
      %2858 = vst [vmem:[%s197 + $0x8] sm:$0xff] %v2854
      %2859 = vst [vmem:[%s197 + $0x10] sm:$0xff] %v2855
      %2860 = vst [vmem:[%s197 + $0x18] sm:$0xff] %v2856
      %p2861 = scmp.lt.s32.totalorder %s15, 1
      %s2862 = scalar_select %p2861, %s15, 1
      %s2863 = smul.addr %s2862, 4
      %s2864 = smul.addr %s2863, 8
      %s2865 = scalar_lea.vmem %s4, %s2864
      // Predicated region
      $region37: #{down_conv_block.1} parent=35 // pred_check
        %p2866 = pneg %p122
      $region38: #{down_conv_block.1} parent=35 // pred_check_branch
        %2868 = sbr.rel (%p2866) target = $region40
      $region39: #{down_conv_block.1} parent=35 // pred_region
        _
      $region40: #{down_conv_block.1} parent=35 // pred_fallthru
        _
    $region36: #{down_conv_block.1} parent=5 // pred_fallthru
      _
    %p2869 = scmp.le.s32.totalorder 2, %s10
    // Predicated region
    $region41: #{down_conv_block.1} parent=5 // pred_check
      %p2870 = pneg %p2869
    $region42: #{down_conv_block.1} parent=5 // pred_check_branch
      %2872 = sbr.rel (%p2870) target = $region44
    $region43: #{down_conv_block.1} parent=5 // pred_region
      %s2873 = ssub.s32 %s10, 2
      // Predicated region
      $region45: #{down_conv_block.1} parent=43 // pred_check
        %p2874 = pneg %p128
      $region46: #{down_conv_block.1} parent=43 // pred_check_branch
        %2876 = sbr.rel (%p2874) target = $region48
      $region47: #{down_conv_block.1} parent=43 // pred_region
        %p2877 = scmp.lt.s32.totalorder %s16, 1
        %s2878 = scalar_select %p2877, %s16, 1
        %s2879 = smul.addr %s2878, 4
        %s2880 = smul.addr %s2879, 8
        %s2881 = scalar_lea.vmem %s4, %s2880
      $region48: #{down_conv_block.1} parent=43 // pred_fallthru
        _
    $region44: #{down_conv_block.1} parent=5 // pred_fallthru
      _
  $region6: #{down_conv_block.1} parent=0 // loop_footer
    %s14 = sadd.s32 1, %s10
  $region7: #{down_conv_block.1} parent=0 // loop_footer_branch
    %9 = sbr.rel target = $region3
  $region8: #{down_conv_block.1} parent=0 // loop_exit
    _

</llo_original>
